<compile_context>
chip_gen: v7x
topology: tpu7x:2x2x1
jax: 0.10.0
libtpu: 0.0.40
codegen_flags: <defaults>
</compile_context>

<pallas_src>
import functools

import jax
import jax.numpy as jnp
from jax import lax
from jax.experimental import pallas as pl
from jax.experimental.pallas import tpu as pltpu


def _sae_kernel(x_ref, wq_ref, bq_ref, wk_ref, out_ref, *, n_valid):
    """One (batch, query-row-tile) grid step.

    x_ref  : (1, C, Npad)   channels-first, flattened spatial on the lane axis
    wq_ref : (C8, C)        query 1x1-conv weight
    bq_ref : (C8, 1)        query bias
    wk_ref : (C8, C)        key 1x1-conv weight (key bias dropped -- cancels)
    out_ref: (1, TQ, Npad)  attention rows for this query tile
    """
    i = pl.program_id(1)
    tq = out_ref.shape[1]

    x = x_ref[0]                                    # (C, Npad), resident in VMEM
    start = pl.multiple_of(i * tq, 128)
    x_q = x_ref[0, :, pl.ds(start, tq)]             # (C, TQ) query columns

    # 1x1 convolutions as matmuls; N stays on the lane axis (lane-dense).
    kT = jnp.dot(wk_ref[...], x, preferred_element_type=jnp.float32)     # (C8, Npad)
    qT = jnp.dot(wq_ref[...], x_q, preferred_element_type=jnp.float32)   # (C8, TQ)
    qT = qT + bq_ref[...]

    # energy = q @ k^T -> (TQ, Npad); contract the small C8 dim (dim 0 of both).
    energy = lax.dot_general(
        qT, kT, (((0,), (0,)), ((), ())), preferred_element_type=jnp.float32
    )

    if n_valid != energy.shape[-1]:
        # Mask padded key columns so they get zero probability.
        col = lax.broadcasted_iota(jnp.int32, energy.shape, 1)
        energy = jnp.where(col < n_valid, energy, -jnp.inf)

    # Row-wise softmax (matches nn.Softmax(dim=-1)).
    m = jnp.max(energy, axis=-1, keepdims=True)
    e = jnp.exp(energy - m)
    s = jnp.sum(e, axis=-1, keepdims=True)
    out_ref[0] = (e * pl.reciprocal(s, approx=True)).astype(out_ref.dtype)


def _choose_tq(n_pad, c, out_itemsize):
    """Largest query-row tile (multiple of 128, divides n_pad) fitting a
    conservative VMEM budget (safe on v7x's 64 MiB VMEM)."""
    budget = 36 * 1024 * 1024

    def est(tq):
        return (
            2 * c * n_pad * 4              # resident x block, double-buffered
            + 2 * tq * n_pad * out_itemsize  # output tile, double-buffered
            + 4 * tq * n_pad * 4           # energy / exp temporaries headroom
        )

    tq = min(512, n_pad)
    while tq > 128 and (n_pad % tq != 0 or est(tq) > budget):
        tq -= 128
    tq = max(tq, 128)
    while n_pad % tq != 0:                 # n_pad is a multiple of 128
        tq -= 128
    return tq


def sae_forward(x, wq, bq, wk, bk=None, *, out_dtype=jnp.float32):
    """x: (B, C, H, W) float32 (NCHW, like PyTorch). Returns (B, N, N)."""
    del bk  # key bias cancels exactly in softmax(dim=-1); never read.
    B, C, H, W = x.shape
    N = H * W
    C8 = wq.shape[0]

    n_pad = ((N + 127) // 128) * 128
    x_flat = x.reshape(B, C, N)                      # pure reshape, no transpose
    if n_pad != N:
        x_flat = jnp.pad(x_flat, ((0, 0), (0, 0), (0, n_pad - N)))
    bq2 = bq.reshape(C8, 1)

    out_itemsize = jnp.dtype(out_dtype).itemsize
    tq = _choose_tq(n_pad, C, out_itemsize)
    grid = (B, n_pad // tq)

    grid_spec = pltpu.PrefetchScalarGridSpec(
        num_scalar_prefetch=0,
        grid=grid,
        in_specs=[
            pl.BlockSpec((1, C, n_pad), lambda b, i: (b, 0, 0)),   # x, resident per batch
            pl.BlockSpec((C8, C), lambda b, i: (0, 0)),            # Wq
            pl.BlockSpec((C8, 1), lambda b, i: (0, 0)),            # bq
            pl.BlockSpec((C8, C), lambda b, i: (0, 0)),            # Wk
        ],
        out_specs=pl.BlockSpec((1, tq, n_pad), lambda b, i: (b, i, 0)),
    )

    out = pl.pallas_call(
        functools.partial(_sae_kernel, n_valid=N),
        out_shape=jax.ShapeDtypeStruct((B, n_pad, n_pad), out_dtype),
        grid_spec=grid_spec,
        compiler_params=pltpu.CompilerParams(
            dimension_semantics=("parallel", "parallel"),
            vmem_limit_bytes=48 * 1024 * 1024,
        ),
    )(x_flat, wq, bq2, wk)

    if n_pad != N:
        out = out[:, :N, :N]
    return out


def sae_reference(x, wq, bq, wk, bk):
    """Plain-JAX reference matching the PyTorch forward (with both biases)."""
    B, C, H, W = x.shape
    N = H * W
    q = jnp.einsum("bchw,oc->bohw", x, wq) + bq[None, :, None, None]
    k = jnp.einsum("bchw,oc->bohw", x, wk) + bk[None, :, None, None]
    proj_query = jnp.transpose(q.reshape(B, -1, N), (0, 2, 1))  # (B, N, C8)
    proj_key = k.reshape(B, -1, N)                              # (B, C8, N)
    energy = jnp.einsum("bnc,bcm->bnm", proj_query, proj_key)   # (B, N, N)
    return jax.nn.softmax(energy, axis=-1)


if __name__ == "__main__":
    # Shapes consistent with the module (in_dim >= 8). N = 576 is not a
    # multiple of 128, so this also exercises the padding/masking + row-tiling
    # paths (n_pad = 640, TQ = 128, grid = (2, 5)).
    B, C, H, W = 2, 16, 24, 24
    C8 = C // 8

    key = jax.random.PRNGKey(0)
    kx, kwq, kbq, kwk, kbk = jax.random.split(key, 5)

    x = jax.random.normal(kx, (B, C, H, W), dtype=jnp.float32)
    wq = jax.random.normal(kwq, (C8, C), dtype=jnp.float32) * 0.1
    bq = jax.random.normal(kbq, (C8,), dtype=jnp.float32) * 0.1
    wk = jax.random.normal(kwk, (C8, C), dtype=jnp.float32) * 0.1
    bk = jax.random.normal(kbk, (C8,), dtype=jnp.float32) * 0.1

    ref = sae_reference(x, wq, bq, wk, bk)

    # f32 output (default, matches PyTorch dtype semantics).
    out = jax.block_until_ready(sae_forward(x, wq, bq, wk, bk))
    assert out.shape == (B, H * W, H * W)
    assert out.dtype == jnp.float32
    assert jnp.allclose(out, ref, atol=2e-3, rtol=2e-3)

    # bf16 output variant (halves the dominant N^2 HBM writeback).
    out_bf16 = jax.block_until_ready(
        sae_forward(x, wq, bq, wk, bk, out_dtype=jnp.bfloat16)
    )
    assert jnp.allclose(out_bf16.astype(jnp.float32), ref, atol=2e-2, rtol=2e-2)

    # No-padding / single-tile path (N = 256 = 2*128).
    x2 = jax.random.normal(kx, (B, C, 16, 16), dtype=jnp.float32)
    out2 = jax.block_until_ready(sae_forward(x2, wq, bq, wk, bk))
    ref2 = sae_reference(x2, wq, bq, wk, bk)
    assert jnp.allclose(out2, ref2, atol=2e-3, rtol=2e-3)

    print("KERNEL_OK")
</pallas_src>

<mosaic_0001>
module attributes {stable_mosaic.version = 11 : i64} {
  func.func @_sae_kernel(%arg0: i32, %arg1: i32, %arg2: memref<1x16x640xf32, #tpu.memory_space<vmem>>, %arg3: memref<2x16xf32, #tpu.memory_space<vmem>>, %arg4: memref<2x1xf32, #tpu.memory_space<vmem>>, %arg5: memref<2x16xf32, #tpu.memory_space<vmem>>, %arg6: memref<1x128x640xf32, #tpu.memory_space<vmem>>) attributes {dimension_semantics = [#tpu.dimension_semantics<parallel>, #tpu.dimension_semantics<parallel>], iteration_bounds = array<i64: 2, 5>, scalar_prefetch = 0 : i64, scratch_operands = 0 : i64, tpu.core_type = #tpu.core_type<tc>, window_params = [{transform_indices = @transform_0, window_bounds = array<i64: 1, 16, 640>}, {pipeline_mode = #tpu.pipeline_mode<synchronous>, transform_indices = @transform_1, window_bounds = array<i64: 2, 16>}, {pipeline_mode = #tpu.pipeline_mode<synchronous>, transform_indices = @transform_2, window_bounds = array<i64: 2, 1>}, {pipeline_mode = #tpu.pipeline_mode<synchronous>, transform_indices = @transform_3, window_bounds = array<i64: 2, 16>}, {transform_indices = @transform_4, window_bounds = array<i64: 1, 128, 640>}]} {
    %c0 = arith.constant 0 : index
    %c0_0 = arith.constant 0 : index
    %c0_1 = arith.constant 0 : index
    %0 = vector.load %arg2[%c0, %c0_0, %c0_1] : memref<1x16x640xf32, #tpu.memory_space<vmem>>, vector<1x16x640xf32>
    %1 = vector.shape_cast %0 : vector<1x16x640xf32> to vector<16x640xf32>
    %c128_i32 = arith.constant 128 : i32
    %2 = arith.muli %arg1, %c128_i32 : i32
    %3 = tpu.assume_multiple %2, 128 : i32
    %c0_2 = arith.constant 0 : index
    %c0_3 = arith.constant 0 : index
    %4 = arith.index_cast %3 : i32 to index
    %5 = vector.load %arg2[%c0_2, %c0_3, %4] : memref<1x16x640xf32, #tpu.memory_space<vmem>>, vector<1x16x128xf32>
    %6 = vector.shape_cast %5 : vector<1x16x128xf32> to vector<16x128xf32>
    %c0_4 = arith.constant 0 : index
    %c0_5 = arith.constant 0 : index
    %7 = vector.load %arg5[%c0_4, %c0_5] : memref<2x16xf32, #tpu.memory_space<vmem>>, vector<2x16xf32>
    %cst = arith.constant dense<0.000000e+00> : vector<2x640xf32>
    %8 = tpu.matmul %7, %1, %cst {dimension_numbers = #tpu.dot_dimension_numbers<[1], [0], [0], [1], [0, 0, 1, 1], [], []>} : vector<2x16xf32>, vector<16x640xf32>, vector<2x640xf32> -> vector<2x640xf32>
    %c0_6 = arith.constant 0 : index
    %c0_7 = arith.constant 0 : index
    %9 = vector.load %arg3[%c0_6, %c0_7] : memref<2x16xf32, #tpu.memory_space<vmem>>, vector<2x16xf32>
    %cst_8 = arith.constant dense<0.000000e+00> : vector<2x128xf32>
    %10 = tpu.matmul %9, %6, %cst_8 {dimension_numbers = #tpu.dot_dimension_numbers<[1], [0], [0], [1], [0, 0, 1, 1], [], []>} : vector<2x16xf32>, vector<16x128xf32>, vector<2x128xf32> -> vector<2x128xf32>
    %c0_9 = arith.constant 0 : index
    %c0_10 = arith.constant 0 : index
    %11 = vector.load %arg4[%c0_9, %c0_10] : memref<2x1xf32, #tpu.memory_space<vmem>>, vector<2x1xf32>
    %12 = vector.broadcast %11 : vector<2x1xf32> to vector<2x128xf32>
    %13 = arith.addf %10, %12 : vector<2x128xf32>
    %cst_11 = arith.constant dense<0.000000e+00> : vector<128x640xf32>
    %14 = tpu.matmul %13, %8, %cst_11 {dimension_numbers = #tpu.dot_dimension_numbers<[0], [0], [1], [1], [0, 1, 1, 1], [], []>} : vector<2x128xf32>, vector<2x640xf32>, vector<128x640xf32> -> vector<128x640xf32>
    %15 = tpu.iota {dimensions = array<i32: 1>} : vector<128x640xi32>
    %c576_i32 = arith.constant 576 : i32
    %16 = vector.broadcast %c576_i32 : i32 to vector<128x640xi32>
    %17 = arith.cmpi slt, %15, %16 : vector<128x640xi32>
    %cst_12 = arith.constant 0xFF800000 : f32
    %18 = vector.broadcast %cst_12 : f32 to vector<128x640xf32>
    %19 = arith.select %17, %14, %18 : vector<128x640xi1>, vector<128x640xf32>
    %cst_13 = arith.constant dense<0xFF800000> : vector<128xf32>
    %20 = vector.multi_reduction <maximumf>, %19, %cst_13 [1] : vector<128x640xf32> to vector<128xf32>
    %21 = vector.shape_cast %20 : vector<128xf32> to vector<128x1xf32>
    %22 = vector.broadcast %21 : vector<128x1xf32> to vector<128x640xf32>
    %23 = arith.subf %19, %22 : vector<128x640xf32>
    %24 = math.exp %23 : vector<128x640xf32>
    %cst_14 = arith.constant dense<0.000000e+00> : vector<128xf32>
    %25 = vector.multi_reduction <add>, %24, %cst_14 [1] : vector<128x640xf32> to vector<128xf32>
    %26 = vector.shape_cast %25 : vector<128xf32> to vector<128x1xf32>
    %27 = tpu.reciprocal %26 {approx = true} : vector<128x1xf32> -> vector<128x1xf32>
    %28 = vector.broadcast %27 : vector<128x1xf32> to vector<128x640xf32>
    %29 = arith.mulf %24, %28 : vector<128x640xf32>
    %c0_15 = arith.constant 0 : index
    %c0_16 = arith.constant 0 : index
    %c0_17 = arith.constant 0 : index
    %30 = vector.load %arg6[%c0_15, %c0_16, %c0_17] : memref<1x128x640xf32, #tpu.memory_space<vmem>>, vector<1x128x640xf32>
    %31 = vector.shape_cast %30 : vector<1x128x640xf32> to vector<128x640xf32>
    %32 = vector.shape_cast %29 : vector<128x640xf32> to vector<1x128x640xf32>
    tpu.vector_store %arg6[%c0_15, %c0_16, %c0_17], %32 {strides = array<i32>} : memref<1x128x640xf32, #tpu.memory_space<vmem>>, vector<1x128x640xf32>,
    return
  }
  func.func @transform_0(%arg0: i32, %arg1: i32) -> (i32, i32, i32) {
    %c0_i32 = arith.constant 0 : i32
    %c0_i32_0 = arith.constant 0 : i32
    %c0_i32_1 = arith.constant 0 : i32
    return %arg0, %c0_i32, %c0_i32_0 : i32, i32, i32
  }
  func.func @transform_1(%arg0: i32, %arg1: i32) -> (i32, i32) {
    %c0_i32 = arith.constant 0 : i32
    %c0_i32_0 = arith.constant 0 : i32
    %c0_i32_1 = arith.constant 0 : i32
    return %c0_i32, %c0_i32_0 : i32, i32
  }
  func.func @transform_2(%arg0: i32, %arg1: i32) -> (i32, i32) {
    %c0_i32 = arith.constant 0 : i32
    %c0_i32_0 = arith.constant 0 : i32
    %c0_i32_1 = arith.constant 0 : i32
    return %c0_i32, %c0_i32_0 : i32, i32
  }
  func.func @transform_3(%arg0: i32, %arg1: i32) -> (i32, i32) {
    %c0_i32 = arith.constant 0 : i32
    %c0_i32_0 = arith.constant 0 : i32
    %c0_i32_1 = arith.constant 0 : i32
    return %c0_i32, %c0_i32_0 : i32, i32
  }
  func.func @transform_4(%arg0: i32, %arg1: i32) -> (i32, i32, i32) {
    %c0_i32 = arith.constant 0 : i32
    %c0_i32_0 = arith.constant 0 : i32
    return %arg0, %arg1, %c0_i32 : i32, i32, i32
  }
}

</mosaic_0001>

<llo_original>
// kernel: tpu_custom_call.1
$region0: #{tpu_custom_call.1}
  #allocation0 [shape = 'u32[]', space=smem, size = 0x4, offset = 0x4, fixed_abs, tag = 'smem constant byte address 0x4 - core index']
  #allocation1 [shape = 'u32[144,128]{1,0:T(1,128)}', space=vmem, size = 0x12000, scoped, tag = 'internal scratch']
  %s0 = inlined_call_operand.hbm [shape: f32[2,16,640], index: 0, kind: input, shape index: {}]
  %s1 = inlined_call_operand.hbm [shape: f32[2,16], index: 1, kind: input, shape index: {}]
  %s2 = inlined_call_operand.vmem [shape: f32[2,1], index: 2, kind: input, shape index: {}]
  %s3 = inlined_call_operand.hbm [shape: f32[2,16], index: 3, kind: input, shape index: {}]
  %s4 = inlined_call_operand.hbm [shape: f32[2,640,640], index: 4, kind: output, shape index: {}]
  %s5 = sld [smem:[#allocation0]]
  $region61: #{tpu_custom_call.1} parent=0
    _
  %s7 = ssub.s32 1, %s5
  %s8 = scalar_select 0, %s7, %s5
  $region1: #{tpu_custom_call.1} parent=0
    #allocation2 [shape = 'u8[81920]{0}', space=vmem, size = 0x14000, scoped, tag = 'input window, operand 0']
    #allocation3 [shape = 's32[2]{0}', space=sflag, size = 0x8, scoped, tag = 'scoped memory for tpu_custom_call.1']
    #allocation4 [shape = 's32[2]{0}', space=sflag, size = 0x8, scoped, tag = 'scoped memory for tpu_custom_call.1']
    #allocation5 [shape = 'u8[1024]{0}', space=vmem, size = 0x400, scoped, tag = 'input window, operand 1, single buffered']
    #allocation6 [shape = 's32[1]{0}', space=sflag, size = 0x4, scoped, tag = 'scoped memory for tpu_custom_call.1']
    #allocation7 [shape = 'u8[1024]{0}', space=vmem, size = 0x400, scoped, tag = 'input window, operand 3, single buffered']
    #allocation8 [shape = 'u8[655360]{0}', space=vmem, size = 0xa0000, scoped, tag = 'output window, operand 0']
    %9 = vsyncpa [#allocation3], 0
    %s10 = scalar_lea.sflag [#allocation3], 1
    %11 = vsyncpa %s10, 0
    %12 = vsyncpa [#allocation6], 0
    %13 = vsyncpa [#allocation4], 0
    %s14 = scalar_lea.sflag [#allocation4], 1
    %15 = vsyncpa %s14, 0
    loop: start=0, step=1, limit=12
    $region2: #{tpu_custom_call.1} parent=1 // loop_pre_header
      _
    $region3: #{tpu_custom_call.1} parent=1 // loop_header
      %s17 = sphi 0, %s21
      %p18 = scmp.ge.s32.totalorder %s17, 12
      %s24 = sphi 0, %s36
      %s25 = sphi 0, %s32
      %s26 = sphi 0, %s24
      %s27 = sphi 0, %s25
      %s28 = sphi 0, %s26
      %s29 = sphi 0, %s27
      %s39 = sphi 0, %s41
      %s42 = sphi 0, %s39
      %s43 = sphi 0, %s42
      %s59 = sphi 0, %s43
      %s63 = sphi 0, %s63
      %s65 = sphi 0, %s63
      %s66 = sphi 0, %s65
      %s80 = sphi 0, %s66
      %s84 = sphi 0, %s84
      %s86 = sphi 0, %s84
      %s87 = sphi 0, %s86
      %s101 = sphi 0, %s87
      %s105 = sphi 0, %s105
      %s107 = sphi 0, %s105
      %s108 = sphi 0, %s107
      %s122 = sphi 0, %s108
      %s130 = sphi 0, %s132
      %s133 = sphi 0, %s130
      %s134 = sphi 0, %s133
      %s150 = sphi 0, %s134
    $region4: #{tpu_custom_call.1} parent=1 // loop_header_branch
      %20 = sbr.rel (%p18) target = $region8
    $region5: #{tpu_custom_call.1} parent=1 // loop_body
      %s22 = ssub.s32 %s17, 1
      %s23 = ssub.s32 %s17, 2
      %s30 = sadd.s32 1, %s25
      %p31 = scmp.ge.s32.totalorder %s30, 5
      %s32 = scalar_select %p31, 0, %s30
      %s33 = sadd.s32 1, %s24
      %s34 = scalar_select %p31, %s33, %s24
      %p35 = scmp.ge.s32.totalorder %s34, 2
      %s36 = scalar_select %p35, 0, %s34
      %s37 = ssub.s32 %s24, %s36
      %p38 = scmp.eq.s32.totalorder %s37, 0
      %s40 = sadd.s32 %s39, 1
      %s41 = scalar_select %p38, %s39, %s40
      %p44 = pneg %p38
      %p45 = scmp.eq.s32.totalorder %s17, 9
      %p46 = por %p44, %p45
      %p47 = scmp.ne.s32.totalorder %s39, %s42
      %p48 = scmp.eq.s32.totalorder %s17, 0
      %p49 = por %p47, %p48
      %p50 = scmp.ne.s32.totalorder %s39, %s42
      %p51 = scmp.eq.s32.totalorder %s22, 9
      %p52 = por %p50, %p51
      %p53 = scmp.ne.s32.totalorder %s42, %s43
      %p54 = scmp.eq.s32.totalorder %s22, 0
      %p55 = por %p53, %p54
      %p56 = scmp.ne.s32.totalorder %s42, %s43
      %p57 = scmp.eq.s32.totalorder %s23, 9
      %p58 = por %p56, %p57
      %p60 = scmp.ne.s32.totalorder %s43, %s59
      %p61 = scmp.eq.s32.totalorder %s23, 0
      %p62 = por %p60, %p61
      %s64 = sadd.s32 %s63, 1
      %p67 = scmp.eq.s32.totalorder %s17, 9
      %p68 = scmp.ne.s32.totalorder %s63, %s65
      %p69 = scmp.eq.s32.totalorder %s17, 0
      %p70 = por %p68, %p69
      %p71 = scmp.ne.s32.totalorder %s63, %s65
      %p72 = scmp.eq.s32.totalorder %s22, 9
      %p73 = por %p71, %p72
      %p74 = scmp.ne.s32.totalorder %s65, %s66
      %p75 = scmp.eq.s32.totalorder %s22, 0
      %p76 = por %p74, %p75
      %p77 = scmp.ne.s32.totalorder %s65, %s66
      %p78 = scmp.eq.s32.totalorder %s23, 9
      %p79 = por %p77, %p78
      %p81 = scmp.ne.s32.totalorder %s66, %s80
      %p82 = scmp.eq.s32.totalorder %s23, 0
      %p83 = por %p81, %p82
      %s85 = sadd.s32 %s84, 1
      %p88 = scmp.eq.s32.totalorder %s17, 9
      %p89 = scmp.ne.s32.totalorder %s84, %s86
      %p90 = scmp.eq.s32.totalorder %s17, 0
      %p91 = por %p89, %p90
      %p92 = scmp.ne.s32.totalorder %s84, %s86
      %p93 = scmp.eq.s32.totalorder %s22, 9
      %p94 = por %p92, %p93
      %p95 = scmp.ne.s32.totalorder %s86, %s87
      %p96 = scmp.eq.s32.totalorder %s22, 0
      %p97 = por %p95, %p96
      %p98 = scmp.ne.s32.totalorder %s86, %s87
      %p99 = scmp.eq.s32.totalorder %s23, 9
      %p100 = por %p98, %p99
      %p102 = scmp.ne.s32.totalorder %s87, %s101
      %p103 = scmp.eq.s32.totalorder %s23, 0
      %p104 = por %p102, %p103
      %s106 = sadd.s32 %s105, 1
      %p109 = scmp.eq.s32.totalorder %s17, 9
      %p110 = scmp.ne.s32.totalorder %s105, %s107
      %p111 = scmp.eq.s32.totalorder %s17, 0
      %p112 = por %p110, %p111
      %p113 = scmp.ne.s32.totalorder %s105, %s107
      %p114 = scmp.eq.s32.totalorder %s22, 9
      %p115 = por %p113, %p114
      %p116 = scmp.ne.s32.totalorder %s107, %s108
      %p117 = scmp.eq.s32.totalorder %s22, 0
      %p118 = por %p116, %p117
      %p119 = scmp.ne.s32.totalorder %s107, %s108
      %p120 = scmp.eq.s32.totalorder %s23, 9
      %p121 = por %p119, %p120
      %p123 = scmp.ne.s32.totalorder %s108, %s122
      %p124 = scmp.eq.s32.totalorder %s23, 0
      %p125 = por %p123, %p124
      %s126 = ssub.s32 %s24, %s36
      %s127 = ssub.s32 %s25, %s32
      %s128 = sor.u32 %s126, %s127
      %p129 = scmp.eq.s32.totalorder %s128, 0
      %s131 = sadd.s32 %s130, 1
      %s132 = scalar_select %p129, %s130, %s131
      %p135 = pneg %p129
      %p136 = scmp.eq.s32.totalorder %s17, 9
      %p137 = por %p135, %p136
      %p138 = scmp.ne.s32.totalorder %s130, %s133
      %p139 = scmp.eq.s32.totalorder %s17, 0
      %p140 = por %p138, %p139
      %p141 = scmp.ne.s32.totalorder %s130, %s133
      %p142 = scmp.eq.s32.totalorder %s22, 9
      %p143 = por %p141, %p142
      %p144 = scmp.ne.s32.totalorder %s133, %s134
      %p145 = scmp.eq.s32.totalorder %s22, 0
      %p146 = por %p144, %p145
      %p147 = scmp.ne.s32.totalorder %s133, %s134
      %p148 = scmp.eq.s32.totalorder %s23, 9
      %p149 = por %p147, %p148
      %p151 = scmp.ne.s32.totalorder %s134, %s150
      %p152 = scmp.eq.s32.totalorder %s23, 0
      %p153 = por %p151, %p152
      %p154 = scmp.le.s32.totalorder 1, %s17
      %p155 = scmp.lt.s32.totalorder %s17, 11
      %p156 = pnand %p154, %p155
      %p157 = pneg %p156
      // Predicated region
      $region9: #{tpu_custom_call.1} parent=5 // pred_check
        _
      $region10: #{tpu_custom_call.1} parent=5 // pred_check_branch
        %159 = sbr.rel (%p156) target = $region12
      $region11: #{tpu_custom_call.1} parent=5 // pred_region
        %s160 = ssub.s32 %s17, 1
        // Predicated region
        $region13: #{tpu_custom_call.1} parent=11 // pred_check
          %p161 = pneg %p76
        $region14: #{tpu_custom_call.1} parent=11 // pred_check_branch
          %163 = sbr.rel (%p161) target = $region16
        $region15: #{tpu_custom_call.1} parent=11 // pred_region
          %s165 = ssub.s32 32, 32
          %166 = vsyncadd [#allocation6], %s165
          %s168 = sshll.u32 [#allocation5], 4
          %s169 = int_to_ptr.vmem [resolvable:$true] %s168
          %171 = dma.hbm_to_vmem [thread:$0]  %s1, 32, %s169, [#allocation6]
        $region16: #{tpu_custom_call.1} parent=11 // pred_fallthru
          _
        // Predicated region
        $region17: #{tpu_custom_call.1} parent=11 // pred_check
          %p172 = pneg %p97
        $region18: #{tpu_custom_call.1} parent=11 // pred_check_branch
          %174 = sbr.rel (%p172) target = $region20
        $region19: #{tpu_custom_call.1} parent=11 // pred_region
          _
        $region20: #{tpu_custom_call.1} parent=11 // pred_fallthru
          _
        // Predicated region
        $region21: #{tpu_custom_call.1} parent=11 // pred_check
          %p175 = pneg %p118
        $region22: #{tpu_custom_call.1} parent=11 // pred_check_branch
          %177 = sbr.rel (%p175) target = $region24
        $region23: #{tpu_custom_call.1} parent=11 // pred_region
          %s179 = ssub.s32 32, 32
          %180 = vsyncadd [#allocation6], %s179
          %s182 = sshll.u32 [#allocation7], 4
          %s183 = int_to_ptr.vmem [resolvable:$true] %s182
          %185 = dma.hbm_to_vmem [thread:$0]  %s3, 32, %s183, [#allocation6]
        $region24: #{tpu_custom_call.1} parent=11 // pred_fallthru
          _
      $region12: #{tpu_custom_call.1} parent=5 // pred_fallthru
        _
      %p186 = scmp.lt.s32.totalorder %s17, 10
      // Predicated region
      $region25: #{tpu_custom_call.1} parent=5 // pred_check
        %p187 = pneg %p186
      $region26: #{tpu_custom_call.1} parent=5 // pred_check_branch
        %189 = sbr.rel (%p187) target = $region28
      $region27: #{tpu_custom_call.1} parent=5 // pred_region
        // Predicated region
        $region29: #{tpu_custom_call.1} parent=27 // pred_check
          %p190 = pneg %p49
        $region30: #{tpu_custom_call.1} parent=27 // pred_check_branch
          %192 = sbr.rel (%p190) target = $region32
        $region31: #{tpu_custom_call.1} parent=27 // pred_region
          %s193 = sand.u32 %s39, 1
          %s194 = scalar_lea.sflag [#allocation3], %s193
          %s195 = sand.u32 %s39, 1
          %s196 = smul.addr %s195, 80
          %s197 = scalar_lea.vmem [#allocation2], %s196
          %s199 = ssub.s32 1280, 1280
          %200 = vsyncadd %s194, %s199
          %s201 = smul.addr %s24, 10
          %s202 = smul.addr %s201, 128
          %s203 = scalar_lea.hbm %s0, %s202
          %s204 = sshll.u32 %s197, 4
          %s205 = int_to_ptr.vmem [resolvable:$true] %s204
          %210 = dma.hbm_to_vmem [thread:$0]  %s203, 1280, %s205, %s194, 640, 640, 40
        $region32: #{tpu_custom_call.1} parent=27 // pred_fallthru
          _
      $region28: #{tpu_custom_call.1} parent=5 // pred_fallthru
        _
      %p211 = scmp.le.s32.totalorder 1, %s17
      %p212 = scmp.lt.s32.totalorder %s17, 11
      %p213 = pnand %p211, %p212
      %p214 = pneg %p213
      // Predicated region
      $region33: #{tpu_custom_call.1} parent=5 // pred_check
        _
      $region34: #{tpu_custom_call.1} parent=5 // pred_check_branch
        %216 = sbr.rel (%p213) target = $region36
      $region35: #{tpu_custom_call.1} parent=5 // pred_region
        %s217 = ssub.s32 %s17, 1
        %s218 = sand.u32 %s42, 1
        %s219 = scalar_lea.sflag [#allocation3], %s218
        %s220 = sand.u32 %s42, 1
        %s221 = smul.addr %s220, 80
        %s222 = scalar_lea.vmem [#allocation2], %s221
        // Predicated region
        $region37: #{tpu_custom_call.1} parent=35 // pred_check
          %p223 = pneg %p55
        $region38: #{tpu_custom_call.1} parent=35 // pred_check_branch
          %225 = sbr.rel (%p223) target = $region40
        $region39: #{tpu_custom_call.1} parent=35 // pred_region
          %226 = dma.done %s219, 1280
        $region40: #{tpu_custom_call.1} parent=35 // pred_fallthru
          _
        // Predicated region
        $region41: #{tpu_custom_call.1} parent=35 // pred_check
          %p227 = pneg %p76
        $region42: #{tpu_custom_call.1} parent=35 // pred_check_branch
          %229 = sbr.rel (%p227) target = $region44
        $region43: #{tpu_custom_call.1} parent=35 // pred_region
          %230 = dma.done [#allocation6], 32
        $region44: #{tpu_custom_call.1} parent=35 // pred_fallthru
          _
        // Predicated region
        $region45: #{tpu_custom_call.1} parent=35 // pred_check
          %p231 = pneg %p118
        $region46: #{tpu_custom_call.1} parent=35 // pred_check_branch
          %233 = sbr.rel (%p231) target = $region48
        $region47: #{tpu_custom_call.1} parent=35 // pred_region
          %234 = dma.done [#allocation6], 32
        $region48: #{tpu_custom_call.1} parent=35 // pred_fallthru
          _
        %s235 = sand.u32 %s42, 1
        %s236 = scalar_lea.sflag [#allocation3], %s235
        %s237 = sand.u32 %s42, 1
        %s238 = smul.addr %s237, 80
        %s239 = scalar_lea.vmem [#allocation2], %s238
        %p240 = pneg %p55
        %p241 = pneg %p52
        %p242 = pneg %p76
        %p243 = pneg %p73
        %p244 = pneg %p97
        %p245 = pneg %p94
        %p246 = pneg %p118
        %p247 = pneg %p115
        %p248 = pneg %p146
        %p249 = pneg %p143
        %s250 = sand.u32 %s133, 1
        %s251 = scalar_lea.sflag [#allocation4], %s250
        %s252 = sand.u32 %s133, 1
        %s253 = smul.addr %s252, 640
        %s254 = scalar_lea.vmem [#allocation8], %s253
        %s255 = smul.u32 16, %s27
        %v256 = vld [vmem:[%s222] sm:$0xff]
        %v257 = vld [vmem:[%s222 + $0x8] sm:$0xff]
        %v258 = vld [vmem:[%s222 + $0x10] sm:$0xff]
        %v259 = vld [vmem:[%s222 + $0x18] sm:$0xff]
        %v260 = vld [vmem:[%s222 + $0x20] sm:$0xff]
        %v261 = vld [vmem:[%s222 + $0x28] sm:$0xff]
        %v262 = vld [vmem:[%s222 + $0x30] sm:$0xff]
        %v263 = vld [vmem:[%s222 + $0x38] sm:$0xff]
        %v264 = vld [vmem:[%s222 + $0x40] sm:$0xff]
        %v265 = vld [vmem:[%s222 + $0x48] sm:$0xff]
        %s266 = smul.u32 %s27, 128
        %s267 = sshra.s32 %s266, 7
        %s268 = sand.u32 %s266, 127
        %s269 = smul.addr %s267, 8
        %s270 = scalar_lea.vmem %s222, %s269 [#allocation2]
        %v271 = vld [vmem:[%s270] sm:$0xff]
        %v272 = vld [vmem:[%s270 + $0x28] sm:$0xff]
        %v273 = vld [vmem:[#allocation7] sm:$0x3]
        %vm274 = vcmask 130048
        %v276 = vsel %vm274, %v273, 0
        %278 = vmatprep.subr.mxu0 %v257
        %279 = vmatpush1.msra.mxu0 %v256
        %280 = vmatprep.subr.mxu0 %v262
        %281 = vmatpush1.msra.mxu0 %v261
        %282 = vmatprep.subr.mxu0 0.0
        %283 = vmatpush1.msra.mxu0 0.0
        %284 = vmatprep.subr.mxu0 0.0
        %285 = vmatpush1.msra.mxu0 0.0
        %286 = vmatprep.subr.mxu0 0.0
        %287 = vmatpush1.msra.mxu0 0.0
        %288 = vmatprep.subr.mxu0 0.0
        %289 = vmatpush1.msra.mxu0 0.0
        %290 = vmatprep.subr.mxu0 0.0
        %291 = vmatpush1.msra.mxu0 0.0
        %292 = vmatprep.subr.mxu0 0.0
        %293 = vmatpush1.msra.mxu0 0.0
        %294 = vmatprep.subr.mxu0 0.0
        %295 = vmatpush1.msra.mxu0 0.0
        %296 = vmatprep.subr.mxu0 0.0
        %297 = vmatpush1.msra.mxu0 0.0
        %298 = vmatprep.subr.mxu0 0.0
        %299 = vmatpush1.msra.mxu0 0.0
        %300 = vmatprep.subr.mxu0 0.0
        %301 = vmatpush1.msra.mxu0 0.0
        %302 = vmatprep.subr.mxu0 0.0
        %303 = vmatpush1.msra.mxu0 0.0
        %304 = vmatprep.subr.mxu0 0.0
        %305 = vmatpush1.msra.mxu0 0.0
        %306 = vmatprep.subr.mxu0 0.0
        %307 = vmatpush1.msra.mxu0 0.0
        %308 = vmatprep.subr.mxu0 0.0
        %309 = vmatpush1.msra.mxu0 0.0
        %310 = vmatprep.subr.mxu0 0.0
        %311 = vmatpush1.msra.mxu0 0.0
        %312 = vmatprep.subr.mxu0 0.0
        %313 = vmatpush1.msra.mxu0 0.0
        %314 = vmatprep.subr.mxu0 0.0
        %315 = vmatpush1.msra.mxu0 0.0
        %316 = vmatprep.subr.mxu0 0.0
        %317 = vmatpush1.msra.mxu0 0.0
        %318 = vmatprep.subr.mxu0 0.0
        %319 = vmatpush1.msra.mxu0 0.0
        %320 = vmatprep.subr.mxu0 0.0
        %321 = vmatpush1.msra.mxu0 0.0
        %322 = vmatprep.subr.mxu0 0.0
        %323 = vmatpush1.msra.mxu0 0.0
        %324 = vmatprep.subr.mxu0 0.0
        %325 = vmatpush1.msra.mxu0 0.0
        %326 = vmatprep.subr.mxu0 0.0
        %327 = vmatpush1.msra.mxu0 0.0
        %328 = vmatprep.subr.mxu0 0.0
        %329 = vmatpush1.msra.mxu0 0.0
        %330 = vmatprep.subr.mxu0 0.0
        %331 = vmatpush1.msra.mxu0 0.0
        %332 = vmatprep.subr.mxu0 0.0
        %333 = vmatpush1.msra.mxu0 0.0
        %334 = vmatprep.subr.mxu0 0.0
        %335 = vmatpush1.msra.mxu0 0.0
        %336 = vmatprep.subr.mxu0 0.0
        %337 = vmatpush1.msra.mxu0 0.0
        %338 = vmatprep.subr.mxu0 0.0
        %339 = vmatpush1.msra.mxu0 0.0
        %340 = vmatprep.subr.mxu0 0.0
        %341 = vmatpush1.msra.mxu0 0.0
        %342 = vmatprep.mubr.f32.mxu0 0.0
        %343 = vmatmul.mubr.f32.gmra.mrb[0].mxu0 %v276
        %v344 = vpop.f32.mrb[0].mxu0
        %v345 = vadd.f32 0.0, %v344
        %v346 = vpop.f32.mrb[0].mxu0
        %v347 = vadd.f32 0.0, %v346
        %348 = vdwg.mxu0
        %349 = vmatprep.subr.mxu0 %v259
        %350 = vmatpush1.msra.mxu0 %v258
        %351 = vmatprep.subr.mxu0 %v264
        %352 = vmatpush1.msra.mxu0 %v263
        %353 = vmatprep.subr.mxu0 0.0
        %354 = vmatpush1.msra.mxu0 0.0
        %355 = vmatprep.subr.mxu0 0.0
        %356 = vmatpush1.msra.mxu0 0.0
        %357 = vmatprep.subr.mxu0 0.0
        %358 = vmatpush1.msra.mxu0 0.0
        %359 = vmatprep.subr.mxu0 0.0
        %360 = vmatpush1.msra.mxu0 0.0
        %361 = vmatprep.subr.mxu0 0.0
        %362 = vmatpush1.msra.mxu0 0.0
        %363 = vmatprep.subr.mxu0 0.0
        %364 = vmatpush1.msra.mxu0 0.0
        %365 = vmatprep.subr.mxu0 0.0
        %366 = vmatpush1.msra.mxu0 0.0
        %367 = vmatprep.subr.mxu0 0.0
        %368 = vmatpush1.msra.mxu0 0.0
        %369 = vmatprep.subr.mxu0 0.0
        %370 = vmatpush1.msra.mxu0 0.0
        %371 = vmatprep.subr.mxu0 0.0
        %372 = vmatpush1.msra.mxu0 0.0
        %373 = vmatprep.subr.mxu0 0.0
        %374 = vmatpush1.msra.mxu0 0.0
        %375 = vmatprep.subr.mxu0 0.0
        %376 = vmatpush1.msra.mxu0 0.0
        %377 = vmatprep.subr.mxu0 0.0
        %378 = vmatpush1.msra.mxu0 0.0
        %379 = vmatprep.subr.mxu0 0.0
        %380 = vmatpush1.msra.mxu0 0.0
        %381 = vmatprep.subr.mxu0 0.0
        %382 = vmatpush1.msra.mxu0 0.0
        %383 = vmatprep.subr.mxu0 0.0
        %384 = vmatpush1.msra.mxu0 0.0
        %385 = vmatprep.subr.mxu0 0.0
        %386 = vmatpush1.msra.mxu0 0.0
        %387 = vmatprep.subr.mxu0 0.0
        %388 = vmatpush1.msra.mxu0 0.0
        %389 = vmatprep.subr.mxu0 0.0
        %390 = vmatpush1.msra.mxu0 0.0
        %391 = vmatprep.subr.mxu0 0.0
        %392 = vmatpush1.msra.mxu0 0.0
        %393 = vmatprep.subr.mxu0 0.0
        %394 = vmatpush1.msra.mxu0 0.0
        %395 = vmatprep.subr.mxu0 0.0
        %396 = vmatpush1.msra.mxu0 0.0
        %397 = vmatprep.subr.mxu0 0.0
        %398 = vmatpush1.msra.mxu0 0.0
        %399 = vmatprep.subr.mxu0 0.0
        %400 = vmatpush1.msra.mxu0 0.0
        %401 = vmatprep.subr.mxu0 0.0
        %402 = vmatpush1.msra.mxu0 0.0
        %403 = vmatprep.subr.mxu0 0.0
        %404 = vmatpush1.msra.mxu0 0.0
        %405 = vmatprep.subr.mxu0 0.0
        %406 = vmatpush1.msra.mxu0 0.0
        %407 = vmatprep.subr.mxu0 0.0
        %408 = vmatpush1.msra.mxu0 0.0
        %409 = vmatprep.subr.mxu0 0.0
        %410 = vmatpush1.msra.mxu0 0.0
        %411 = vmatprep.subr.mxu0 0.0
        %412 = vmatpush1.msra.mxu0 0.0
        %413 = vmatprep.mubr.f32.mxu0 0.0
        %414 = vmatmul.mubr.f32.gmra.mrb[0].mxu0 %v276
        %v415 = vpop.f32.mrb[0].mxu0
        %v416 = vadd.f32 0.0, %v415
        %v417 = vpop.f32.mrb[0].mxu0
        %v418 = vadd.f32 0.0, %v417
        %419 = vdwg.mxu0
        %420 = vmatprep.subr.mxu0 0.0
        %421 = vmatpush1.msra.mxu0 %v260
        %422 = vmatprep.subr.mxu0 0.0
        %423 = vmatpush1.msra.mxu0 %v265
        %424 = vmatprep.subr.mxu0 0.0
        %425 = vmatpush1.msra.mxu0 0.0
        %426 = vmatprep.subr.mxu0 0.0
        %427 = vmatpush1.msra.mxu0 0.0
        %428 = vmatprep.subr.mxu0 0.0
        %429 = vmatpush1.msra.mxu0 0.0
        %430 = vmatprep.subr.mxu0 0.0
        %431 = vmatpush1.msra.mxu0 0.0
        %432 = vmatprep.subr.mxu0 0.0
        %433 = vmatpush1.msra.mxu0 0.0
        %434 = vmatprep.subr.mxu0 0.0
        %435 = vmatpush1.msra.mxu0 0.0
        %436 = vmatprep.subr.mxu0 0.0
        %437 = vmatpush1.msra.mxu0 0.0
        %438 = vmatprep.subr.mxu0 0.0
        %439 = vmatpush1.msra.mxu0 0.0
        %440 = vmatprep.subr.mxu0 0.0
        %441 = vmatpush1.msra.mxu0 0.0
        %442 = vmatprep.subr.mxu0 0.0
        %443 = vmatpush1.msra.mxu0 0.0
        %444 = vmatprep.subr.mxu0 0.0
        %445 = vmatpush1.msra.mxu0 0.0
        %446 = vmatprep.subr.mxu0 0.0
        %447 = vmatpush1.msra.mxu0 0.0
        %448 = vmatprep.subr.mxu0 0.0
        %449 = vmatpush1.msra.mxu0 0.0
        %450 = vmatprep.subr.mxu0 0.0
        %451 = vmatpush1.msra.mxu0 0.0
        %452 = vmatprep.subr.mxu0 0.0
        %453 = vmatpush1.msra.mxu0 0.0
        %454 = vmatprep.subr.mxu0 0.0
        %455 = vmatpush1.msra.mxu0 0.0
        %456 = vmatprep.subr.mxu0 0.0
        %457 = vmatpush1.msra.mxu0 0.0
        %458 = vmatprep.subr.mxu0 0.0
        %459 = vmatpush1.msra.mxu0 0.0
        %460 = vmatprep.subr.mxu0 0.0
        %461 = vmatpush1.msra.mxu0 0.0
        %462 = vmatprep.subr.mxu0 0.0
        %463 = vmatpush1.msra.mxu0 0.0
        %464 = vmatprep.subr.mxu0 0.0
        %465 = vmatpush1.msra.mxu0 0.0
        %466 = vmatprep.subr.mxu0 0.0
        %467 = vmatpush1.msra.mxu0 0.0
        %468 = vmatprep.subr.mxu0 0.0
        %469 = vmatpush1.msra.mxu0 0.0
        %470 = vmatprep.subr.mxu0 0.0
        %471 = vmatpush1.msra.mxu0 0.0
        %472 = vmatprep.subr.mxu0 0.0
        %473 = vmatpush1.msra.mxu0 0.0
        %474 = vmatprep.subr.mxu0 0.0
        %475 = vmatpush1.msra.mxu0 0.0
        %476 = vmatprep.subr.mxu0 0.0
        %477 = vmatpush1.msra.mxu0 0.0
        %478 = vmatprep.subr.mxu0 0.0
        %479 = vmatpush1.msra.mxu0 0.0
        %480 = vmatprep.subr.mxu0 0.0
        %481 = vmatpush1.msra.mxu0 0.0
        %482 = vmatprep.subr.mxu0 0.0
        %483 = vmatpush1.msra.mxu0 0.0
        %484 = vmatprep.mubr.f32.mxu0 0.0
        %485 = vmatmul.mubr.f32.gmra.mrb[0].mxu0 %v276
        %v486 = vpop.f32.mrb[0].mxu0
        %v487 = vadd.f32 0.0, %v486
        %v488 = vpop.f32.mrb[0].mxu0
        %489 = vdwg.mxu0
        %v490 = vld [vmem:[#allocation5] sm:$0x3]
        %v491 = vld [vmem:[%s2] sm:$0x3]
        %493 = vset.pattern.permute.xlu0 0
        %494 = vperm.xlu0 %493, %v491
        %v495 = vpop.permute.xlu0 %494
        %v498 = vsel %vm274, %v490, 0
        %500 = vmatprep.subr.mxu0 0.0
        %501 = vmatpush1.msra.mxu0 %v271
        %502 = vmatprep.subr.mxu0 0.0
        %503 = vmatpush1.msra.mxu0 %v272
        %504 = vmatprep.subr.mxu0 0.0
        %505 = vmatpush1.msra.mxu0 0.0
        %506 = vmatprep.subr.mxu0 0.0
        %507 = vmatpush1.msra.mxu0 0.0
        %508 = vmatprep.subr.mxu0 0.0
        %509 = vmatpush1.msra.mxu0 0.0
        %510 = vmatprep.subr.mxu0 0.0
        %511 = vmatpush1.msra.mxu0 0.0
        %512 = vmatprep.subr.mxu0 0.0
        %513 = vmatpush1.msra.mxu0 0.0
        %514 = vmatprep.subr.mxu0 0.0
        %515 = vmatpush1.msra.mxu0 0.0
        %516 = vmatprep.subr.mxu0 0.0
        %517 = vmatpush1.msra.mxu0 0.0
        %518 = vmatprep.subr.mxu0 0.0
        %519 = vmatpush1.msra.mxu0 0.0
        %520 = vmatprep.subr.mxu0 0.0
        %521 = vmatpush1.msra.mxu0 0.0
        %522 = vmatprep.subr.mxu0 0.0
        %523 = vmatpush1.msra.mxu0 0.0
        %524 = vmatprep.subr.mxu0 0.0
        %525 = vmatpush1.msra.mxu0 0.0
        %526 = vmatprep.subr.mxu0 0.0
        %527 = vmatpush1.msra.mxu0 0.0
        %528 = vmatprep.subr.mxu0 0.0
        %529 = vmatpush1.msra.mxu0 0.0
        %530 = vmatprep.subr.mxu0 0.0
        %531 = vmatpush1.msra.mxu0 0.0
        %532 = vmatprep.subr.mxu0 0.0
        %533 = vmatpush1.msra.mxu0 0.0
        %534 = vmatprep.subr.mxu0 0.0
        %535 = vmatpush1.msra.mxu0 0.0
        %536 = vmatprep.subr.mxu0 0.0
        %537 = vmatpush1.msra.mxu0 0.0
        %538 = vmatprep.subr.mxu0 0.0
        %539 = vmatpush1.msra.mxu0 0.0
        %540 = vmatprep.subr.mxu0 0.0
        %541 = vmatpush1.msra.mxu0 0.0
        %542 = vmatprep.subr.mxu0 0.0
        %543 = vmatpush1.msra.mxu0 0.0
        %544 = vmatprep.subr.mxu0 0.0
        %545 = vmatpush1.msra.mxu0 0.0
        %546 = vmatprep.subr.mxu0 0.0
        %547 = vmatpush1.msra.mxu0 0.0
        %548 = vmatprep.subr.mxu0 0.0
        %549 = vmatpush1.msra.mxu0 0.0
        %550 = vmatprep.subr.mxu0 0.0
        %551 = vmatpush1.msra.mxu0 0.0
        %552 = vmatprep.subr.mxu0 0.0
        %553 = vmatpush1.msra.mxu0 0.0
        %554 = vmatprep.subr.mxu0 0.0
        %555 = vmatpush1.msra.mxu0 0.0
        %556 = vmatprep.subr.mxu0 0.0
        %557 = vmatpush1.msra.mxu0 0.0
        %558 = vmatprep.subr.mxu0 0.0
        %559 = vmatpush1.msra.mxu0 0.0
        %560 = vmatprep.subr.mxu0 0.0
        %561 = vmatpush1.msra.mxu0 0.0
        %562 = vmatprep.subr.mxu0 0.0
        %563 = vmatpush1.msra.mxu0 0.0
        %564 = vmatprep.mubr.f32.mxu0 0.0
        %565 = vmatmul.mubr.f32.gmra.mrb[0].mxu0 %v498
        %v566 = vpop.f32.mrb[0].mxu0
        %v567 = vadd.f32 %v495, %v566
        %v568 = vpop.f32.mrb[0].mxu0
        %569 = vdwg.mxu0
        %570 = vxpose.xlu0.b32.start [1/16] %v567, 128
        %571 = vxpose.xlu0.b32.cont [2/16] 0.0, 128
        %572 = vxpose.xlu0.b32.cont [3/16] 0.0, 128
        %573 = vxpose.xlu0.b32.cont [4/16] 0.0, 128
        %574 = vxpose.xlu0.b32.cont [5/16] 0.0, 128
        %575 = vxpose.xlu0.b32.cont [6/16] 0.0, 128
        %576 = vxpose.xlu0.b32.cont [7/16] 0.0, 128
        %577 = vxpose.xlu0.b32.cont [8/16] 0.0, 128
        %578 = vxpose.xlu0.b32.cont [9/16] 0.0, 128
        %579 = vxpose.xlu0.b32.cont [10/16] 0.0, 128
        %580 = vxpose.xlu0.b32.cont [11/16] 0.0, 128
        %581 = vxpose.xlu0.b32.cont [12/16] 0.0, 128
        %582 = vxpose.xlu0.b32.cont [13/16] 0.0, 128
        %583 = vxpose.xlu0.b32.cont [14/16] 0.0, 128
        %584 = vxpose.xlu0.b32.cont [15/16] 0.0, 128
        %585 = vxpose.xlu0.b32.end [16/16] 0.0, 128
        %v586 = vpop.trf.xlu0
        %v587 = vpop.trf.xlu0
        %v588 = vpop.trf.xlu0
        %v589 = vpop.trf.xlu0
        %v590 = vpop.trf.xlu0
        %v591 = vpop.trf.xlu0
        %v592 = vpop.trf.xlu0
        %v593 = vpop.trf.xlu0
        %v594 = vpop.trf.xlu0
        %v595 = vpop.trf.xlu0
        %v596 = vpop.trf.xlu0
        %v597 = vpop.trf.xlu0
        %v598 = vpop.trf.xlu0
        %v599 = vpop.trf.xlu0
        %v600 = vpop.trf.xlu0
        %v601 = vpop.trf.xlu0
        %vm602 = vcmask 15360
        %v604 = vsel %vm602, %v586, 0
        %v607 = vsel %vm602, %v587, 0
        %v610 = vsel %vm602, %v588, 0
        %v613 = vsel %vm602, %v589, 0
        %v616 = vsel %vm602, %v590, 0
        %v619 = vsel %vm602, %v591, 0
        %v622 = vsel %vm602, %v592, 0
        %v625 = vsel %vm602, %v593, 0
        %v628 = vsel %vm602, %v594, 0
        %v631 = vsel %vm602, %v595, 0
        %v634 = vsel %vm602, %v596, 0
        %v637 = vsel %vm602, %v597, 0
        %v640 = vsel %vm602, %v598, 0
        %v643 = vsel %vm602, %v599, 0
        %v646 = vsel %vm602, %v600, 0
        %v649 = vsel %vm602, %v601, 0
        %vm651 = vcmask 1041408
        %v653 = vsel %vm651, %v345, 0
        %v656 = vsel %vm651, %v347, 0
        %v659 = vsel %vm651, %v416, 0
        %v662 = vsel %vm651, %v418, 0
        %v665 = vsel %vm651, %v487, 0
        %667 = vmatprep.subr.mxu0 %v656
        %668 = vmatpush1.msra.mxu0 %v653
        %669 = vmatprep.subr.mxu0 0.0
        %670 = vmatpush1.msra.mxu0 0.0
        %671 = vmatprep.subr.mxu0 0.0
        %672 = vmatpush1.msra.mxu0 0.0
        %673 = vmatprep.subr.mxu0 0.0
        %674 = vmatpush1.msra.mxu0 0.0
        %675 = vmatprep.subr.mxu0 0.0
        %676 = vmatpush1.msra.mxu0 0.0
        %677 = vmatprep.subr.mxu0 0.0
        %678 = vmatpush1.msra.mxu0 0.0
        %679 = vmatprep.subr.mxu0 0.0
        %680 = vmatpush1.msra.mxu0 0.0
        %681 = vmatprep.subr.mxu0 0.0
        %682 = vmatpush1.msra.mxu0 0.0
        %683 = vmatprep.subr.mxu0 0.0
        %684 = vmatpush1.msra.mxu0 0.0
        %685 = vmatprep.subr.mxu0 0.0
        %686 = vmatpush1.msra.mxu0 0.0
        %687 = vmatprep.subr.mxu0 0.0
        %688 = vmatpush1.msra.mxu0 0.0
        %689 = vmatprep.subr.mxu0 0.0
        %690 = vmatpush1.msra.mxu0 0.0
        %691 = vmatprep.subr.mxu0 0.0
        %692 = vmatpush1.msra.mxu0 0.0
        %693 = vmatprep.subr.mxu0 0.0
        %694 = vmatpush1.msra.mxu0 0.0
        %695 = vmatprep.subr.mxu0 0.0
        %696 = vmatpush1.msra.mxu0 0.0
        %697 = vmatprep.subr.mxu0 0.0
        %698 = vmatpush1.msra.mxu0 0.0
        %699 = vmatprep.subr.mxu0 0.0
        %700 = vmatpush1.msra.mxu0 0.0
        %701 = vmatprep.subr.mxu0 0.0
        %702 = vmatpush1.msra.mxu0 0.0
        %703 = vmatprep.subr.mxu0 0.0
        %704 = vmatpush1.msra.mxu0 0.0
        %705 = vmatprep.subr.mxu0 0.0
        %706 = vmatpush1.msra.mxu0 0.0
        %707 = vmatprep.subr.mxu0 0.0
        %708 = vmatpush1.msra.mxu0 0.0
        %709 = vmatprep.subr.mxu0 0.0
        %710 = vmatpush1.msra.mxu0 0.0
        %711 = vmatprep.subr.mxu0 0.0
        %712 = vmatpush1.msra.mxu0 0.0
        %713 = vmatprep.subr.mxu0 0.0
        %714 = vmatpush1.msra.mxu0 0.0
        %715 = vmatprep.subr.mxu0 0.0
        %716 = vmatpush1.msra.mxu0 0.0
        %717 = vmatprep.subr.mxu0 0.0
        %718 = vmatpush1.msra.mxu0 0.0
        %719 = vmatprep.subr.mxu0 0.0
        %720 = vmatpush1.msra.mxu0 0.0
        %721 = vmatprep.subr.mxu0 0.0
        %722 = vmatpush1.msra.mxu0 0.0
        %723 = vmatprep.subr.mxu0 0.0
        %724 = vmatpush1.msra.mxu0 0.0
        %725 = vmatprep.subr.mxu0 0.0
        %726 = vmatpush1.msra.mxu0 0.0
        %727 = vmatprep.subr.mxu0 0.0
        %728 = vmatpush1.msra.mxu0 0.0
        %729 = vmatprep.subr.mxu0 0.0
        %730 = vmatpush1.msra.mxu0 0.0
        %731 = vmatprep.mubr.f32.mxu0 0.0
        %732 = vmatmul.mubr.f32.gmra.mrb[0].mxu0 %v604
        %v733 = vpop.f32.mrb[0].mxu0
        %v734 = vadd.f32 0.0, %v733
        %v735 = vpop.f32.mrb[0].mxu0
        %v736 = vadd.f32 0.0, %v735
        %737 = vmatprep.mubr.f32.mxu0 0.0
        %738 = vmatmul.mubr.f32.gmra.mrb[0].mxu0 %v607
        %v739 = vpop.f32.mrb[0].mxu0
        %v740 = vadd.f32 0.0, %v739
        %v741 = vpop.f32.mrb[0].mxu0
        %v742 = vadd.f32 0.0, %v741
        %743 = vmatprep.mubr.f32.mxu0 0.0
        %744 = vmatmul.mubr.f32.gmra.mrb[0].mxu0 %v610
        %v745 = vpop.f32.mrb[0].mxu0
        %v746 = vadd.f32 0.0, %v745
        %v747 = vpop.f32.mrb[0].mxu0
        %v748 = vadd.f32 0.0, %v747
        %749 = vmatprep.mubr.f32.mxu0 0.0
        %750 = vmatmul.mubr.f32.gmra.mrb[0].mxu0 %v613
        %v751 = vpop.f32.mrb[0].mxu0
        %v752 = vadd.f32 0.0, %v751
        %v753 = vpop.f32.mrb[0].mxu0
        %v754 = vadd.f32 0.0, %v753
        %755 = vmatprep.mubr.f32.mxu0 0.0
        %756 = vmatmul.mubr.f32.gmra.mrb[0].mxu0 %v616
        %v757 = vpop.f32.mrb[0].mxu0
        %v758 = vadd.f32 0.0, %v757
        %v759 = vpop.f32.mrb[0].mxu0
        %v760 = vadd.f32 0.0, %v759
        %761 = vmatprep.mubr.f32.mxu0 0.0
        %762 = vmatmul.mubr.f32.gmra.mrb[0].mxu0 %v619
        %v763 = vpop.f32.mrb[0].mxu0
        %v764 = vadd.f32 0.0, %v763
        %v765 = vpop.f32.mrb[0].mxu0
        %v766 = vadd.f32 0.0, %v765
        %767 = vmatprep.mubr.f32.mxu0 0.0
        %768 = vmatmul.mubr.f32.gmra.mrb[0].mxu0 %v622
        %v769 = vpop.f32.mrb[0].mxu0
        %v770 = vadd.f32 0.0, %v769
        %v771 = vpop.f32.mrb[0].mxu0
        %v772 = vadd.f32 0.0, %v771
        %773 = vmatprep.mubr.f32.mxu0 0.0
        %774 = vmatmul.mubr.f32.gmra.mrb[0].mxu0 %v625
        %v775 = vpop.f32.mrb[0].mxu0
        %v776 = vadd.f32 0.0, %v775
        %v777 = vpop.f32.mrb[0].mxu0
        %v778 = vadd.f32 0.0, %v777
        %779 = vmatprep.mubr.f32.mxu0 0.0
        %780 = vmatmul.mubr.f32.gmra.mrb[0].mxu0 %v628
        %v781 = vpop.f32.mrb[0].mxu0
        %v782 = vadd.f32 0.0, %v781
        %v783 = vpop.f32.mrb[0].mxu0
        %v784 = vadd.f32 0.0, %v783
        %785 = vmatprep.mubr.f32.mxu0 0.0
        %786 = vmatmul.mubr.f32.gmra.mrb[0].mxu0 %v631
        %v787 = vpop.f32.mrb[0].mxu0
        %v788 = vadd.f32 0.0, %v787
        %v789 = vpop.f32.mrb[0].mxu0
        %v790 = vadd.f32 0.0, %v789
        %791 = vmatprep.mubr.f32.mxu0 0.0
        %792 = vmatmul.mubr.f32.gmra.mrb[0].mxu0 %v634
        %v793 = vpop.f32.mrb[0].mxu0
        %v794 = vadd.f32 0.0, %v793
        %v795 = vpop.f32.mrb[0].mxu0
        %v796 = vadd.f32 0.0, %v795
        %797 = vmatprep.mubr.f32.mxu0 0.0
        %798 = vmatmul.mubr.f32.gmra.mrb[0].mxu0 %v637
        %v799 = vpop.f32.mrb[0].mxu0
        %v800 = vadd.f32 0.0, %v799
        %v801 = vpop.f32.mrb[0].mxu0
        %v802 = vadd.f32 0.0, %v801
        %803 = vmatprep.mubr.f32.mxu0 0.0
        %804 = vmatmul.mubr.f32.gmra.mrb[0].mxu0 %v640
        %v805 = vpop.f32.mrb[0].mxu0
        %v806 = vadd.f32 0.0, %v805
        %v807 = vpop.f32.mrb[0].mxu0
        %v808 = vadd.f32 0.0, %v807
        %809 = vmatprep.mubr.f32.mxu0 0.0
        %810 = vmatmul.mubr.f32.gmra.mrb[0].mxu0 %v643
        %v811 = vpop.f32.mrb[0].mxu0
        %v812 = vadd.f32 0.0, %v811
        %v813 = vpop.f32.mrb[0].mxu0
        %v814 = vadd.f32 0.0, %v813
        %815 = vmatprep.mubr.f32.mxu0 0.0
        %816 = vmatmul.mubr.f32.gmra.mrb[0].mxu0 %v646
        %v817 = vpop.f32.mrb[0].mxu0
        %v818 = vadd.f32 0.0, %v817
        %v819 = vpop.f32.mrb[0].mxu0
        %v820 = vadd.f32 0.0, %v819
        %821 = vmatprep.mubr.f32.mxu0 0.0
        %822 = vmatmul.mubr.f32.gmra.mrb[0].mxu0 %v649
        %v823 = vpop.f32.mrb[0].mxu0
        %v824 = vadd.f32 0.0, %v823
        %v825 = vpop.f32.mrb[0].mxu0
        %v826 = vadd.f32 0.0, %v825
        %827 = vdwg.mxu0
        %828 = vmatprep.subr.mxu0 %v662
        %829 = vmatpush1.msra.mxu0 %v659
        %830 = vmatprep.subr.mxu0 0.0
        %831 = vmatpush1.msra.mxu0 0.0
        %832 = vmatprep.subr.mxu0 0.0
        %833 = vmatpush1.msra.mxu0 0.0
        %834 = vmatprep.subr.mxu0 0.0
        %835 = vmatpush1.msra.mxu0 0.0
        %836 = vmatprep.subr.mxu0 0.0
        %837 = vmatpush1.msra.mxu0 0.0
        %838 = vmatprep.subr.mxu0 0.0
        %839 = vmatpush1.msra.mxu0 0.0
        %840 = vmatprep.subr.mxu0 0.0
        %841 = vmatpush1.msra.mxu0 0.0
        %842 = vmatprep.subr.mxu0 0.0
        %843 = vmatpush1.msra.mxu0 0.0
        %844 = vmatprep.subr.mxu0 0.0
        %845 = vmatpush1.msra.mxu0 0.0
        %846 = vmatprep.subr.mxu0 0.0
        %847 = vmatpush1.msra.mxu0 0.0
        %848 = vmatprep.subr.mxu0 0.0
        %849 = vmatpush1.msra.mxu0 0.0
        %850 = vmatprep.subr.mxu0 0.0
        %851 = vmatpush1.msra.mxu0 0.0
        %852 = vmatprep.subr.mxu0 0.0
        %853 = vmatpush1.msra.mxu0 0.0
        %854 = vmatprep.subr.mxu0 0.0
        %855 = vmatpush1.msra.mxu0 0.0
        %856 = vmatprep.subr.mxu0 0.0
        %857 = vmatpush1.msra.mxu0 0.0
        %858 = vmatprep.subr.mxu0 0.0
        %859 = vmatpush1.msra.mxu0 0.0
        %860 = vmatprep.subr.mxu0 0.0
        %861 = vmatpush1.msra.mxu0 0.0
        %862 = vmatprep.subr.mxu0 0.0
        %863 = vmatpush1.msra.mxu0 0.0
        %864 = vmatprep.subr.mxu0 0.0
        %865 = vmatpush1.msra.mxu0 0.0
        %866 = vmatprep.subr.mxu0 0.0
        %867 = vmatpush1.msra.mxu0 0.0
        %868 = vmatprep.subr.mxu0 0.0
        %869 = vmatpush1.msra.mxu0 0.0
        %870 = vmatprep.subr.mxu0 0.0
        %871 = vmatpush1.msra.mxu0 0.0
        %872 = vmatprep.subr.mxu0 0.0
        %873 = vmatpush1.msra.mxu0 0.0
        %874 = vmatprep.subr.mxu0 0.0
        %875 = vmatpush1.msra.mxu0 0.0
        %876 = vmatprep.subr.mxu0 0.0
        %877 = vmatpush1.msra.mxu0 0.0
        %878 = vmatprep.subr.mxu0 0.0
        %879 = vmatpush1.msra.mxu0 0.0
        %880 = vmatprep.subr.mxu0 0.0
        %881 = vmatpush1.msra.mxu0 0.0
        %882 = vmatprep.subr.mxu0 0.0
        %883 = vmatpush1.msra.mxu0 0.0
        %884 = vmatprep.subr.mxu0 0.0
        %885 = vmatpush1.msra.mxu0 0.0
        %886 = vmatprep.subr.mxu0 0.0
        %887 = vmatpush1.msra.mxu0 0.0
        %888 = vmatprep.subr.mxu0 0.0
        %889 = vmatpush1.msra.mxu0 0.0
        %890 = vmatprep.subr.mxu0 0.0
        %891 = vmatpush1.msra.mxu0 0.0
        %892 = vmatprep.mubr.f32.mxu0 0.0
        %893 = vmatmul.mubr.f32.gmra.mrb[0].mxu0 %v604
        %v894 = vpop.f32.mrb[0].mxu0
        %v895 = vadd.f32 0.0, %v894
        %v896 = vpop.f32.mrb[0].mxu0
        %v897 = vadd.f32 0.0, %v896
        %898 = vmatprep.mubr.f32.mxu0 0.0
        %899 = vmatmul.mubr.f32.gmra.mrb[0].mxu0 %v607
        %v900 = vpop.f32.mrb[0].mxu0
        %v901 = vadd.f32 0.0, %v900
        %v902 = vpop.f32.mrb[0].mxu0
        %v903 = vadd.f32 0.0, %v902
        %904 = vmatprep.mubr.f32.mxu0 0.0
        %905 = vmatmul.mubr.f32.gmra.mrb[0].mxu0 %v610
        %v906 = vpop.f32.mrb[0].mxu0
        %v907 = vadd.f32 0.0, %v906
        %v908 = vpop.f32.mrb[0].mxu0
        %v909 = vadd.f32 0.0, %v908
        %910 = vmatprep.mubr.f32.mxu0 0.0
        %911 = vmatmul.mubr.f32.gmra.mrb[0].mxu0 %v613
        %v912 = vpop.f32.mrb[0].mxu0
        %v913 = vadd.f32 0.0, %v912
        %v914 = vpop.f32.mrb[0].mxu0
        %v915 = vadd.f32 0.0, %v914
        %916 = vmatprep.mubr.f32.mxu0 0.0
        %917 = vmatmul.mubr.f32.gmra.mrb[0].mxu0 %v616
        %v918 = vpop.f32.mrb[0].mxu0
        %v919 = vadd.f32 0.0, %v918
        %v920 = vpop.f32.mrb[0].mxu0
        %v921 = vadd.f32 0.0, %v920
        %922 = vmatprep.mubr.f32.mxu0 0.0
        %923 = vmatmul.mubr.f32.gmra.mrb[0].mxu0 %v619
        %v924 = vpop.f32.mrb[0].mxu0
        %v925 = vadd.f32 0.0, %v924
        %v926 = vpop.f32.mrb[0].mxu0
        %v927 = vadd.f32 0.0, %v926
        %928 = vmatprep.mubr.f32.mxu0 0.0
        %929 = vmatmul.mubr.f32.gmra.mrb[0].mxu0 %v622
        %v930 = vpop.f32.mrb[0].mxu0
        %v931 = vadd.f32 0.0, %v930
        %v932 = vpop.f32.mrb[0].mxu0
        %v933 = vadd.f32 0.0, %v932
        %934 = vmatprep.mubr.f32.mxu0 0.0
        %935 = vmatmul.mubr.f32.gmra.mrb[0].mxu0 %v625
        %v936 = vpop.f32.mrb[0].mxu0
        %v937 = vadd.f32 0.0, %v936
        %v938 = vpop.f32.mrb[0].mxu0
        %v939 = vadd.f32 0.0, %v938
        %940 = vmatprep.mubr.f32.mxu0 0.0
        %941 = vmatmul.mubr.f32.gmra.mrb[0].mxu0 %v628
        %v942 = vpop.f32.mrb[0].mxu0
        %v943 = vadd.f32 0.0, %v942
        %v944 = vpop.f32.mrb[0].mxu0
        %v945 = vadd.f32 0.0, %v944
        %946 = vmatprep.mubr.f32.mxu0 0.0
        %947 = vmatmul.mubr.f32.gmra.mrb[0].mxu0 %v631
        %v948 = vpop.f32.mrb[0].mxu0
        %v949 = vadd.f32 0.0, %v948
        %v950 = vpop.f32.mrb[0].mxu0
        %v951 = vadd.f32 0.0, %v950
        %952 = vmatprep.mubr.f32.mxu0 0.0
        %953 = vmatmul.mubr.f32.gmra.mrb[0].mxu0 %v634
        %v954 = vpop.f32.mrb[0].mxu0
        %v955 = vadd.f32 0.0, %v954
        %v956 = vpop.f32.mrb[0].mxu0
        %v957 = vadd.f32 0.0, %v956
        %958 = vmatprep.mubr.f32.mxu0 0.0
        %959 = vmatmul.mubr.f32.gmra.mrb[0].mxu0 %v637
        %v960 = vpop.f32.mrb[0].mxu0
        %v961 = vadd.f32 0.0, %v960
        %v962 = vpop.f32.mrb[0].mxu0
        %v963 = vadd.f32 0.0, %v962
        %964 = vmatprep.mubr.f32.mxu0 0.0
        %965 = vmatmul.mubr.f32.gmra.mrb[0].mxu0 %v640
        %v966 = vpop.f32.mrb[0].mxu0
        %v967 = vadd.f32 0.0, %v966
        %v968 = vpop.f32.mrb[0].mxu0
        %v969 = vadd.f32 0.0, %v968
        %970 = vmatprep.mubr.f32.mxu0 0.0
        %971 = vmatmul.mubr.f32.gmra.mrb[0].mxu0 %v643
        %v972 = vpop.f32.mrb[0].mxu0
        %v973 = vadd.f32 0.0, %v972
        %v974 = vpop.f32.mrb[0].mxu0
        %v975 = vadd.f32 0.0, %v974
        %976 = vmatprep.mubr.f32.mxu0 0.0
        %977 = vmatmul.mubr.f32.gmra.mrb[0].mxu0 %v646
        %v978 = vpop.f32.mrb[0].mxu0
        %v979 = vadd.f32 0.0, %v978
        %v980 = vpop.f32.mrb[0].mxu0
        %v981 = vadd.f32 0.0, %v980
        %982 = vmatprep.mubr.f32.mxu0 0.0
        %983 = vmatmul.mubr.f32.gmra.mrb[0].mxu0 %v649
        %v984 = vpop.f32.mrb[0].mxu0
        %v985 = vadd.f32 0.0, %v984
        %v986 = vpop.f32.mrb[0].mxu0
        %v987 = vadd.f32 0.0, %v986
        %988 = vdwg.mxu0
        %989 = vmatprep.subr.mxu0 0.0
        %990 = vmatpush1.msra.mxu0 %v665
        %991 = vmatprep.subr.mxu0 0.0
        %992 = vmatpush1.msra.mxu0 0.0
        %993 = vmatprep.subr.mxu0 0.0
        %994 = vmatpush1.msra.mxu0 0.0
        %995 = vmatprep.subr.mxu0 0.0
        %996 = vmatpush1.msra.mxu0 0.0
        %997 = vmatprep.subr.mxu0 0.0
        %998 = vmatpush1.msra.mxu0 0.0
        %999 = vmatprep.subr.mxu0 0.0
        %1000 = vmatpush1.msra.mxu0 0.0
        %1001 = vmatprep.subr.mxu0 0.0
        %1002 = vmatpush1.msra.mxu0 0.0
        %1003 = vmatprep.subr.mxu0 0.0
        %1004 = vmatpush1.msra.mxu0 0.0
        %1005 = vmatprep.subr.mxu0 0.0
        %1006 = vmatpush1.msra.mxu0 0.0
        %1007 = vmatprep.subr.mxu0 0.0
        %1008 = vmatpush1.msra.mxu0 0.0
        %1009 = vmatprep.subr.mxu0 0.0
        %1010 = vmatpush1.msra.mxu0 0.0
        %1011 = vmatprep.subr.mxu0 0.0
        %1012 = vmatpush1.msra.mxu0 0.0
        %1013 = vmatprep.subr.mxu0 0.0
        %1014 = vmatpush1.msra.mxu0 0.0
        %1015 = vmatprep.subr.mxu0 0.0
        %1016 = vmatpush1.msra.mxu0 0.0
        %1017 = vmatprep.subr.mxu0 0.0
        %1018 = vmatpush1.msra.mxu0 0.0
        %1019 = vmatprep.subr.mxu0 0.0
        %1020 = vmatpush1.msra.mxu0 0.0
        %1021 = vmatprep.subr.mxu0 0.0
        %1022 = vmatpush1.msra.mxu0 0.0
        %1023 = vmatprep.subr.mxu0 0.0
        %1024 = vmatpush1.msra.mxu0 0.0
        %1025 = vmatprep.subr.mxu0 0.0
        %1026 = vmatpush1.msra.mxu0 0.0
        %1027 = vmatprep.subr.mxu0 0.0
        %1028 = vmatpush1.msra.mxu0 0.0
        %1029 = vmatprep.subr.mxu0 0.0
        %1030 = vmatpush1.msra.mxu0 0.0
        %1031 = vmatprep.subr.mxu0 0.0
        %1032 = vmatpush1.msra.mxu0 0.0
        %1033 = vmatprep.subr.mxu0 0.0
        %1034 = vmatpush1.msra.mxu0 0.0
        %1035 = vmatprep.subr.mxu0 0.0
        %1036 = vmatpush1.msra.mxu0 0.0
        %1037 = vmatprep.subr.mxu0 0.0
        %1038 = vmatpush1.msra.mxu0 0.0
        %1039 = vmatprep.subr.mxu0 0.0
        %1040 = vmatpush1.msra.mxu0 0.0
        %1041 = vmatprep.subr.mxu0 0.0
        %1042 = vmatpush1.msra.mxu0 0.0
        %1043 = vmatprep.subr.mxu0 0.0
        %1044 = vmatpush1.msra.mxu0 0.0
        %1045 = vmatprep.subr.mxu0 0.0
        %1046 = vmatpush1.msra.mxu0 0.0
        %1047 = vmatprep.subr.mxu0 0.0
        %1048 = vmatpush1.msra.mxu0 0.0
        %1049 = vmatprep.subr.mxu0 0.0
        %1050 = vmatpush1.msra.mxu0 0.0
        %1051 = vmatprep.subr.mxu0 0.0
        %1052 = vmatpush1.msra.mxu0 0.0
        %1053 = vmatprep.mubr.f32.mxu0 0.0
        %1054 = vmatmul.mubr.f32.gmra.mrb[0].mxu0 %v604
        %v1055 = vpop.f32.mrb[0].mxu0
        %v1056 = vadd.f32 0.0, %v1055
        %v1057 = vpop.f32.mrb[0].mxu0
        %1058 = vmatprep.mubr.f32.mxu0 0.0
        %1059 = vmatmul.mubr.f32.gmra.mrb[0].mxu0 %v607
        %v1060 = vpop.f32.mrb[0].mxu0
        %v1061 = vadd.f32 0.0, %v1060
        %v1062 = vpop.f32.mrb[0].mxu0
        %1063 = vmatprep.mubr.f32.mxu0 0.0
        %1064 = vmatmul.mubr.f32.gmra.mrb[0].mxu0 %v610
        %v1065 = vpop.f32.mrb[0].mxu0
        %v1066 = vadd.f32 0.0, %v1065
        %v1067 = vpop.f32.mrb[0].mxu0
        %1068 = vmatprep.mubr.f32.mxu0 0.0
        %1069 = vmatmul.mubr.f32.gmra.mrb[0].mxu0 %v613
        %v1070 = vpop.f32.mrb[0].mxu0
        %v1071 = vadd.f32 0.0, %v1070
        %v1072 = vpop.f32.mrb[0].mxu0
        %1073 = vmatprep.mubr.f32.mxu0 0.0
        %1074 = vmatmul.mubr.f32.gmra.mrb[0].mxu0 %v616
        %v1075 = vpop.f32.mrb[0].mxu0
        %v1076 = vadd.f32 0.0, %v1075
        %v1077 = vpop.f32.mrb[0].mxu0
        %1078 = vmatprep.mubr.f32.mxu0 0.0
        %1079 = vmatmul.mubr.f32.gmra.mrb[0].mxu0 %v619
        %v1080 = vpop.f32.mrb[0].mxu0
        %v1081 = vadd.f32 0.0, %v1080
        %v1082 = vpop.f32.mrb[0].mxu0
        %1083 = vmatprep.mubr.f32.mxu0 0.0
        %1084 = vmatmul.mubr.f32.gmra.mrb[0].mxu0 %v622
        %v1085 = vpop.f32.mrb[0].mxu0
        %v1086 = vadd.f32 0.0, %v1085
        %v1087 = vpop.f32.mrb[0].mxu0
        %1088 = vmatprep.mubr.f32.mxu0 0.0
        %1089 = vmatmul.mubr.f32.gmra.mrb[0].mxu0 %v625
        %v1090 = vpop.f32.mrb[0].mxu0
        %v1091 = vadd.f32 0.0, %v1090
        %v1092 = vpop.f32.mrb[0].mxu0
        %1093 = vmatprep.mubr.f32.mxu0 0.0
        %1094 = vmatmul.mubr.f32.gmra.mrb[0].mxu0 %v628
        %v1095 = vpop.f32.mrb[0].mxu0
        %v1096 = vadd.f32 0.0, %v1095
        %v1097 = vpop.f32.mrb[0].mxu0
        %1098 = vmatprep.mubr.f32.mxu0 0.0
        %1099 = vmatmul.mubr.f32.gmra.mrb[0].mxu0 %v631
        %v1100 = vpop.f32.mrb[0].mxu0
        %v1101 = vadd.f32 0.0, %v1100
        %v1102 = vpop.f32.mrb[0].mxu0
        %1103 = vmatprep.mubr.f32.mxu0 0.0
        %1104 = vmatmul.mubr.f32.gmra.mrb[0].mxu0 %v634
        %v1105 = vpop.f32.mrb[0].mxu0
        %v1106 = vadd.f32 0.0, %v1105
        %v1107 = vpop.f32.mrb[0].mxu0
        %1108 = vmatprep.mubr.f32.mxu0 0.0
        %1109 = vmatmul.mubr.f32.gmra.mrb[0].mxu0 %v637
        %v1110 = vpop.f32.mrb[0].mxu0
        %v1111 = vadd.f32 0.0, %v1110
        %v1112 = vpop.f32.mrb[0].mxu0
        %1113 = vmatprep.mubr.f32.mxu0 0.0
        %1114 = vmatmul.mubr.f32.gmra.mrb[0].mxu0 %v640
        %v1115 = vpop.f32.mrb[0].mxu0
        %v1116 = vadd.f32 0.0, %v1115
        %v1117 = vpop.f32.mrb[0].mxu0
        %1118 = vmatprep.mubr.f32.mxu0 0.0
        %1119 = vmatmul.mubr.f32.gmra.mrb[0].mxu0 %v643
        %v1120 = vpop.f32.mrb[0].mxu0
        %v1121 = vadd.f32 0.0, %v1120
        %v1122 = vpop.f32.mrb[0].mxu0
        %1123 = vmatprep.mubr.f32.mxu0 0.0
        %1124 = vmatmul.mubr.f32.gmra.mrb[0].mxu0 %v646
        %v1125 = vpop.f32.mrb[0].mxu0
        %v1126 = vadd.f32 0.0, %v1125
        %v1127 = vpop.f32.mrb[0].mxu0
        %1128 = vmatprep.mubr.f32.mxu0 0.0
        %1129 = vmatmul.mubr.f32.gmra.mrb[0].mxu0 %v649
        %v1130 = vpop.f32.mrb[0].mxu0
        %v1131 = vadd.f32 0.0, %v1130
        %v1132 = vpop.f32.mrb[0].mxu0
        %1133 = vdwg.mxu0
        %v1134 = vlaneseq
        %v1135 = vand.u32 %v1134, 127
        %v1136 = vadd.s32 %v1135, 128
        %v1137 = vadd.s32 %v1135, 256
        %v1138 = vadd.s32 %v1135, 384
        %v1139 = vadd.s32 %v1135, 512
        %vm1140 = vcmp.lt.s32.totalorder %v1135, 576
        %vm1141 = vcmp.lt.s32.totalorder %v1136, 576
        %vm1142 = vcmp.lt.s32.totalorder %v1137, 576
        %vm1143 = vcmp.lt.s32.totalorder %v1138, 576
        %vm1144 = vcmp.lt.s32.totalorder %v1139, 576
        %v1145 = vsel %vm1140, %v734, -inf
        %v1146 = vsel %vm1141, %v736, -inf
        %v1147 = vsel %vm1142, %v895, -inf
        %v1148 = vsel %vm1143, %v897, -inf
        %v1149 = vsel %vm1144, %v1056, -inf
        %v1150 = vsel %vm1140, %v740, -inf
        %v1151 = vsel %vm1141, %v742, -inf
        %v1152 = vsel %vm1142, %v901, -inf
        %v1153 = vsel %vm1143, %v903, -inf
        %v1154 = vsel %vm1144, %v1061, -inf
        %v1155 = vsel %vm1140, %v746, -inf
        %v1156 = vsel %vm1141, %v748, -inf
        %v1157 = vsel %vm1142, %v907, -inf
        %v1158 = vsel %vm1143, %v909, -inf
        %v1159 = vsel %vm1144, %v1066, -inf
        %v1160 = vsel %vm1140, %v752, -inf
        %v1161 = vsel %vm1141, %v754, -inf
        %v1162 = vsel %vm1142, %v913, -inf
        %v1163 = vsel %vm1143, %v915, -inf
        %v1164 = vsel %vm1144, %v1071, -inf
        %v1165 = vsel %vm1140, %v758, -inf
        %v1166 = vsel %vm1141, %v760, -inf
        %v1167 = vsel %vm1142, %v919, -inf
        %v1168 = vsel %vm1143, %v921, -inf
        %v1169 = vsel %vm1144, %v1076, -inf
        %v1170 = vsel %vm1140, %v764, -inf
        %v1171 = vsel %vm1141, %v766, -inf
        %v1172 = vsel %vm1142, %v925, -inf
        %v1173 = vsel %vm1143, %v927, -inf
        %v1174 = vsel %vm1144, %v1081, -inf
        %v1175 = vsel %vm1140, %v770, -inf
        %v1176 = vsel %vm1141, %v772, -inf
        %v1177 = vsel %vm1142, %v931, -inf
        %v1178 = vsel %vm1143, %v933, -inf
        %v1179 = vsel %vm1144, %v1086, -inf
        %v1180 = vsel %vm1140, %v776, -inf
        %v1181 = vsel %vm1141, %v778, -inf
        %v1182 = vsel %vm1142, %v937, -inf
        %v1183 = vsel %vm1143, %v939, -inf
        %v1184 = vsel %vm1144, %v1091, -inf
        %v1185 = vsel %vm1140, %v782, -inf
        %v1186 = vsel %vm1141, %v784, -inf
        %v1187 = vsel %vm1142, %v943, -inf
        %v1188 = vsel %vm1143, %v945, -inf
        %v1189 = vsel %vm1144, %v1096, -inf
        %v1190 = vsel %vm1140, %v788, -inf
        %v1191 = vsel %vm1141, %v790, -inf
        %v1192 = vsel %vm1142, %v949, -inf
        %v1193 = vsel %vm1143, %v951, -inf
        %v1194 = vsel %vm1144, %v1101, -inf
        %v1195 = vsel %vm1140, %v794, -inf
        %v1196 = vsel %vm1141, %v796, -inf
        %v1197 = vsel %vm1142, %v955, -inf
        %v1198 = vsel %vm1143, %v957, -inf
        %v1199 = vsel %vm1144, %v1106, -inf
        %v1200 = vsel %vm1140, %v800, -inf
        %v1201 = vsel %vm1141, %v802, -inf
        %v1202 = vsel %vm1142, %v961, -inf
        %v1203 = vsel %vm1143, %v963, -inf
        %v1204 = vsel %vm1144, %v1111, -inf
        %v1205 = vsel %vm1140, %v806, -inf
        %v1206 = vsel %vm1141, %v808, -inf
        %v1207 = vsel %vm1142, %v967, -inf
        %v1208 = vsel %vm1143, %v969, -inf
        %v1209 = vsel %vm1144, %v1116, -inf
        %v1210 = vsel %vm1140, %v812, -inf
        %v1211 = vsel %vm1141, %v814, -inf
        %v1212 = vsel %vm1142, %v973, -inf
        %v1213 = vsel %vm1143, %v975, -inf
        %v1214 = vsel %vm1144, %v1121, -inf
        %v1215 = vsel %vm1140, %v818, -inf
        %v1216 = vsel %vm1141, %v820, -inf
        %v1217 = vsel %vm1142, %v979, -inf
        %v1218 = vsel %vm1143, %v981, -inf
        %v1219 = vsel %vm1144, %v1126, -inf
        %v1220 = vsel %vm1140, %v824, -inf
        %v1221 = vsel %vm1141, %v826, -inf
        %v1222 = vsel %vm1142, %v985, -inf
        %v1223 = vsel %vm1143, %v987, -inf
        %v1224 = vsel %vm1144, %v1131, -inf
        %v1225 = vmax.f32 %v1145, %v1146
        %v1226 = vmax.f32 %v1225, %v1147
        %v1227 = vmax.f32 %v1226, %v1148
        %v1228 = vmax.f32 %v1227, %v1149
        %1229 = vmax.xlane.f32.xlu0 %v1228
        %v1230 = vpop.xlane.xlu0 %1229
        %v1231 = vmax.f32 %v1150, %v1151
        %v1232 = vmax.f32 %v1231, %v1152
        %v1233 = vmax.f32 %v1232, %v1153
        %v1234 = vmax.f32 %v1233, %v1154
        %1235 = vmax.xlane.f32.xlu0 %v1234
        %v1236 = vpop.xlane.xlu0 %1235
        %v1237 = vmax.f32 %v1155, %v1156
        %v1238 = vmax.f32 %v1237, %v1157
        %v1239 = vmax.f32 %v1238, %v1158
        %v1240 = vmax.f32 %v1239, %v1159
        %1241 = vmax.xlane.f32.xlu0 %v1240
        %v1242 = vpop.xlane.xlu0 %1241
        %v1243 = vmax.f32 %v1160, %v1161
        %v1244 = vmax.f32 %v1243, %v1162
        %v1245 = vmax.f32 %v1244, %v1163
        %v1246 = vmax.f32 %v1245, %v1164
        %1247 = vmax.xlane.f32.xlu0 %v1246
        %v1248 = vpop.xlane.xlu0 %1247
        %v1249 = vmax.f32 %v1165, %v1166
        %v1250 = vmax.f32 %v1249, %v1167
        %v1251 = vmax.f32 %v1250, %v1168
        %v1252 = vmax.f32 %v1251, %v1169
        %1253 = vmax.xlane.f32.xlu0 %v1252
        %v1254 = vpop.xlane.xlu0 %1253
        %v1255 = vmax.f32 %v1170, %v1171
        %v1256 = vmax.f32 %v1255, %v1172
        %v1257 = vmax.f32 %v1256, %v1173
        %v1258 = vmax.f32 %v1257, %v1174
        %1259 = vmax.xlane.f32.xlu0 %v1258
        %v1260 = vpop.xlane.xlu0 %1259
        %v1261 = vmax.f32 %v1175, %v1176
        %v1262 = vmax.f32 %v1261, %v1177
        %v1263 = vmax.f32 %v1262, %v1178
        %v1264 = vmax.f32 %v1263, %v1179
        %1265 = vmax.xlane.f32.xlu0 %v1264
        %v1266 = vpop.xlane.xlu0 %1265
        %v1267 = vmax.f32 %v1180, %v1181
        %v1268 = vmax.f32 %v1267, %v1182
        %v1269 = vmax.f32 %v1268, %v1183
        %v1270 = vmax.f32 %v1269, %v1184
        %1271 = vmax.xlane.f32.xlu0 %v1270
        %v1272 = vpop.xlane.xlu0 %1271
        %v1273 = vmax.f32 %v1185, %v1186
        %v1274 = vmax.f32 %v1273, %v1187
        %v1275 = vmax.f32 %v1274, %v1188
        %v1276 = vmax.f32 %v1275, %v1189
        %1277 = vmax.xlane.f32.xlu0 %v1276
        %v1278 = vpop.xlane.xlu0 %1277
        %v1279 = vmax.f32 %v1190, %v1191
        %v1280 = vmax.f32 %v1279, %v1192
        %v1281 = vmax.f32 %v1280, %v1193
        %v1282 = vmax.f32 %v1281, %v1194
        %1283 = vmax.xlane.f32.xlu0 %v1282
        %v1284 = vpop.xlane.xlu0 %1283
        %v1285 = vmax.f32 %v1195, %v1196
        %v1286 = vmax.f32 %v1285, %v1197
        %v1287 = vmax.f32 %v1286, %v1198
        %v1288 = vmax.f32 %v1287, %v1199
        %1289 = vmax.xlane.f32.xlu0 %v1288
        %v1290 = vpop.xlane.xlu0 %1289
        %v1291 = vmax.f32 %v1200, %v1201
        %v1292 = vmax.f32 %v1291, %v1202
        %v1293 = vmax.f32 %v1292, %v1203
        %v1294 = vmax.f32 %v1293, %v1204
        %1295 = vmax.xlane.f32.xlu0 %v1294
        %v1296 = vpop.xlane.xlu0 %1295
        %v1297 = vmax.f32 %v1205, %v1206
        %v1298 = vmax.f32 %v1297, %v1207
        %v1299 = vmax.f32 %v1298, %v1208
        %v1300 = vmax.f32 %v1299, %v1209
        %1301 = vmax.xlane.f32.xlu0 %v1300
        %v1302 = vpop.xlane.xlu0 %1301
        %v1303 = vmax.f32 %v1210, %v1211
        %v1304 = vmax.f32 %v1303, %v1212
        %v1305 = vmax.f32 %v1304, %v1213
        %v1306 = vmax.f32 %v1305, %v1214
        %1307 = vmax.xlane.f32.xlu0 %v1306
        %v1308 = vpop.xlane.xlu0 %1307
        %v1309 = vmax.f32 %v1215, %v1216
        %v1310 = vmax.f32 %v1309, %v1217
        %v1311 = vmax.f32 %v1310, %v1218
        %v1312 = vmax.f32 %v1311, %v1219
        %1313 = vmax.xlane.f32.xlu0 %v1312
        %v1314 = vpop.xlane.xlu0 %1313
        %v1315 = vmax.f32 %v1220, %v1221
        %v1316 = vmax.f32 %v1315, %v1222
        %v1317 = vmax.f32 %v1316, %v1223
        %v1318 = vmax.f32 %v1317, %v1224
        %1319 = vmax.xlane.f32.xlu0 %v1318
        %v1320 = vpop.xlane.xlu0 %1319
        %v1321 = vsub.f32 %v1145, %v1230
        %v1322 = vsub.f32 %v1146, %v1230
        %v1323 = vsub.f32 %v1147, %v1230
        %v1324 = vsub.f32 %v1148, %v1230
        %v1325 = vsub.f32 %v1149, %v1230
        %v1326 = vsub.f32 %v1150, %v1236
        %v1327 = vsub.f32 %v1151, %v1236
        %v1328 = vsub.f32 %v1152, %v1236
        %v1329 = vsub.f32 %v1153, %v1236
        %v1330 = vsub.f32 %v1154, %v1236
        %v1331 = vsub.f32 %v1155, %v1242
        %v1332 = vsub.f32 %v1156, %v1242
        %v1333 = vsub.f32 %v1157, %v1242
        %v1334 = vsub.f32 %v1158, %v1242
        %v1335 = vsub.f32 %v1159, %v1242
        %v1336 = vsub.f32 %v1160, %v1248
        %v1337 = vsub.f32 %v1161, %v1248
        %v1338 = vsub.f32 %v1162, %v1248
        %v1339 = vsub.f32 %v1163, %v1248
        %v1340 = vsub.f32 %v1164, %v1248
        %v1341 = vsub.f32 %v1165, %v1254
        %v1342 = vsub.f32 %v1166, %v1254
        %v1343 = vsub.f32 %v1167, %v1254
        %v1344 = vsub.f32 %v1168, %v1254
        %v1345 = vsub.f32 %v1169, %v1254
        %v1346 = vsub.f32 %v1170, %v1260
        %v1347 = vsub.f32 %v1171, %v1260
        %v1348 = vsub.f32 %v1172, %v1260
        %v1349 = vsub.f32 %v1173, %v1260
        %v1350 = vsub.f32 %v1174, %v1260
        %v1351 = vsub.f32 %v1175, %v1266
        %v1352 = vsub.f32 %v1176, %v1266
        %v1353 = vsub.f32 %v1177, %v1266
        %v1354 = vsub.f32 %v1178, %v1266
        %v1355 = vsub.f32 %v1179, %v1266
        %v1356 = vsub.f32 %v1180, %v1272
        %v1357 = vsub.f32 %v1181, %v1272
        %v1358 = vsub.f32 %v1182, %v1272
        %v1359 = vsub.f32 %v1183, %v1272
        %v1360 = vsub.f32 %v1184, %v1272
        %v1361 = vsub.f32 %v1185, %v1278
        %v1362 = vsub.f32 %v1186, %v1278
        %v1363 = vsub.f32 %v1187, %v1278
        %v1364 = vsub.f32 %v1188, %v1278
        %v1365 = vsub.f32 %v1189, %v1278
        %v1366 = vsub.f32 %v1190, %v1284
        %v1367 = vsub.f32 %v1191, %v1284
        %v1368 = vsub.f32 %v1192, %v1284
        %v1369 = vsub.f32 %v1193, %v1284
        %v1370 = vsub.f32 %v1194, %v1284
        %v1371 = vsub.f32 %v1195, %v1290
        %v1372 = vsub.f32 %v1196, %v1290
        %v1373 = vsub.f32 %v1197, %v1290
        %v1374 = vsub.f32 %v1198, %v1290
        %v1375 = vsub.f32 %v1199, %v1290
        %v1376 = vsub.f32 %v1200, %v1296
        %v1377 = vsub.f32 %v1201, %v1296
        %v1378 = vsub.f32 %v1202, %v1296
        %v1379 = vsub.f32 %v1203, %v1296
        %v1380 = vsub.f32 %v1204, %v1296
        %v1381 = vsub.f32 %v1205, %v1302
        %v1382 = vsub.f32 %v1206, %v1302
        %v1383 = vsub.f32 %v1207, %v1302
        %v1384 = vsub.f32 %v1208, %v1302
        %v1385 = vsub.f32 %v1209, %v1302
        %v1386 = vsub.f32 %v1210, %v1308
        %v1387 = vsub.f32 %v1211, %v1308
        %v1388 = vsub.f32 %v1212, %v1308
        %v1389 = vsub.f32 %v1213, %v1308
        %v1390 = vsub.f32 %v1214, %v1308
        %v1391 = vsub.f32 %v1215, %v1314
        %v1392 = vsub.f32 %v1216, %v1314
        %v1393 = vsub.f32 %v1217, %v1314
        %v1394 = vsub.f32 %v1218, %v1314
        %v1395 = vsub.f32 %v1219, %v1314
        %v1396 = vsub.f32 %v1220, %v1320
        %v1397 = vsub.f32 %v1221, %v1320
        %v1398 = vsub.f32 %v1222, %v1320
        %v1399 = vsub.f32 %v1223, %v1320
        %v1400 = vsub.f32 %v1224, %v1320
        %v1401 = vmul.f32 %v1321, 1.442695
        %v1402 = vpow.pop %v1401
        %v1403 = vmul.f32 %v1322, 1.442695
        %v1404 = vpow.pop %v1403
        %v1405 = vmul.f32 %v1323, 1.442695
        %v1406 = vpow.pop %v1405
        %v1407 = vmul.f32 %v1324, 1.442695
        %v1408 = vpow.pop %v1407
        %v1409 = vmul.f32 %v1325, 1.442695
        %v1410 = vpow.pop %v1409
        %v1411 = vmul.f32 %v1326, 1.442695
        %v1412 = vpow.pop %v1411
        %v1413 = vmul.f32 %v1327, 1.442695
        %v1414 = vpow.pop %v1413
        %v1415 = vmul.f32 %v1328, 1.442695
        %v1416 = vpow.pop %v1415
        %v1417 = vmul.f32 %v1329, 1.442695
        %v1418 = vpow.pop %v1417
        %v1419 = vmul.f32 %v1330, 1.442695
        %v1420 = vpow.pop %v1419
        %v1421 = vmul.f32 %v1331, 1.442695
        %v1422 = vpow.pop %v1421
        %v1423 = vmul.f32 %v1332, 1.442695
        %v1424 = vpow.pop %v1423
        %v1425 = vmul.f32 %v1333, 1.442695
        %v1426 = vpow.pop %v1425
        %v1427 = vmul.f32 %v1334, 1.442695
        %v1428 = vpow.pop %v1427
        %v1429 = vmul.f32 %v1335, 1.442695
        %v1430 = vpow.pop %v1429
        %v1431 = vmul.f32 %v1336, 1.442695
        %v1432 = vpow.pop %v1431
        %v1433 = vmul.f32 %v1337, 1.442695
        %v1434 = vpow.pop %v1433
        %v1435 = vmul.f32 %v1338, 1.442695
        %v1436 = vpow.pop %v1435
        %v1437 = vmul.f32 %v1339, 1.442695
        %v1438 = vpow.pop %v1437
        %v1439 = vmul.f32 %v1340, 1.442695
        %v1440 = vpow.pop %v1439
        %v1441 = vmul.f32 %v1341, 1.442695
        %v1442 = vpow.pop %v1441
        %v1443 = vmul.f32 %v1342, 1.442695
        %v1444 = vpow.pop %v1443
        %v1445 = vmul.f32 %v1343, 1.442695
        %v1446 = vpow.pop %v1445
        %v1447 = vmul.f32 %v1344, 1.442695
        %v1448 = vpow.pop %v1447
        %v1449 = vmul.f32 %v1345, 1.442695
        %v1450 = vpow.pop %v1449
        %v1451 = vmul.f32 %v1346, 1.442695
        %v1452 = vpow.pop %v1451
        %v1453 = vmul.f32 %v1347, 1.442695
        %v1454 = vpow.pop %v1453
        %v1455 = vmul.f32 %v1348, 1.442695
        %v1456 = vpow.pop %v1455
        %v1457 = vmul.f32 %v1349, 1.442695
        %v1458 = vpow.pop %v1457
        %v1459 = vmul.f32 %v1350, 1.442695
        %v1460 = vpow.pop %v1459
        %v1461 = vmul.f32 %v1351, 1.442695
        %v1462 = vpow.pop %v1461
        %v1463 = vmul.f32 %v1352, 1.442695
        %v1464 = vpow.pop %v1463
        %v1465 = vmul.f32 %v1353, 1.442695
        %v1466 = vpow.pop %v1465
        %v1467 = vmul.f32 %v1354, 1.442695
        %v1468 = vpow.pop %v1467
        %v1469 = vmul.f32 %v1355, 1.442695
        %v1470 = vpow.pop %v1469
        %v1471 = vmul.f32 %v1356, 1.442695
        %v1472 = vpow.pop %v1471
        %v1473 = vmul.f32 %v1357, 1.442695
        %v1474 = vpow.pop %v1473
        %v1475 = vmul.f32 %v1358, 1.442695
        %v1476 = vpow.pop %v1475
        %v1477 = vmul.f32 %v1359, 1.442695
        %v1478 = vpow.pop %v1477
        %v1479 = vmul.f32 %v1360, 1.442695
        %v1480 = vpow.pop %v1479
        %v1481 = vmul.f32 %v1361, 1.442695
        %v1482 = vpow.pop %v1481
        %v1483 = vmul.f32 %v1362, 1.442695
        %v1484 = vpow.pop %v1483
        %v1485 = vmul.f32 %v1363, 1.442695
        %v1486 = vpow.pop %v1485
        %v1487 = vmul.f32 %v1364, 1.442695
        %v1488 = vpow.pop %v1487
        %v1489 = vmul.f32 %v1365, 1.442695
        %v1490 = vpow.pop %v1489
        %v1491 = vmul.f32 %v1366, 1.442695
        %v1492 = vpow.pop %v1491
        %v1493 = vmul.f32 %v1367, 1.442695
        %v1494 = vpow.pop %v1493
        %v1495 = vmul.f32 %v1368, 1.442695
        %v1496 = vpow.pop %v1495
        %v1497 = vmul.f32 %v1369, 1.442695
        %v1498 = vpow.pop %v1497
        %v1499 = vmul.f32 %v1370, 1.442695
        %v1500 = vpow.pop %v1499
        %v1501 = vmul.f32 %v1371, 1.442695
        %v1502 = vpow.pop %v1501
        %v1503 = vmul.f32 %v1372, 1.442695
        %v1504 = vpow.pop %v1503
        %v1505 = vmul.f32 %v1373, 1.442695
        %v1506 = vpow.pop %v1505
        %v1507 = vmul.f32 %v1374, 1.442695
        %v1508 = vpow.pop %v1507
        %v1509 = vmul.f32 %v1375, 1.442695
        %v1510 = vpow.pop %v1509
        %v1511 = vmul.f32 %v1376, 1.442695
        %v1512 = vpow.pop %v1511
        %v1513 = vmul.f32 %v1377, 1.442695
        %v1514 = vpow.pop %v1513
        %v1515 = vmul.f32 %v1378, 1.442695
        %v1516 = vpow.pop %v1515
        %v1517 = vmul.f32 %v1379, 1.442695
        %v1518 = vpow.pop %v1517
        %v1519 = vmul.f32 %v1380, 1.442695
        %v1520 = vpow.pop %v1519
        %v1521 = vmul.f32 %v1381, 1.442695
        %v1522 = vpow.pop %v1521
        %v1523 = vmul.f32 %v1382, 1.442695
        %v1524 = vpow.pop %v1523
        %v1525 = vmul.f32 %v1383, 1.442695
        %v1526 = vpow.pop %v1525
        %v1527 = vmul.f32 %v1384, 1.442695
        %v1528 = vpow.pop %v1527
        %v1529 = vmul.f32 %v1385, 1.442695
        %v1530 = vpow.pop %v1529
        %v1531 = vmul.f32 %v1386, 1.442695
        %v1532 = vpow.pop %v1531
        %v1533 = vmul.f32 %v1387, 1.442695
        %v1534 = vpow.pop %v1533
        %v1535 = vmul.f32 %v1388, 1.442695
        %v1536 = vpow.pop %v1535
        %v1537 = vmul.f32 %v1389, 1.442695
        %v1538 = vpow.pop %v1537
        %v1539 = vmul.f32 %v1390, 1.442695
        %v1540 = vpow.pop %v1539
        %v1541 = vmul.f32 %v1391, 1.442695
        %v1542 = vpow.pop %v1541
        %v1543 = vmul.f32 %v1392, 1.442695
        %v1544 = vpow.pop %v1543
        %v1545 = vmul.f32 %v1393, 1.442695
        %v1546 = vpow.pop %v1545
        %v1547 = vmul.f32 %v1394, 1.442695
        %v1548 = vpow.pop %v1547
        %v1549 = vmul.f32 %v1395, 1.442695
        %v1550 = vpow.pop %v1549
        %v1551 = vmul.f32 %v1396, 1.442695
        %v1552 = vpow.pop %v1551
        %v1553 = vmul.f32 %v1397, 1.442695
        %v1554 = vpow.pop %v1553
        %v1555 = vmul.f32 %v1398, 1.442695
        %v1556 = vpow.pop %v1555
        %v1557 = vmul.f32 %v1399, 1.442695
        %v1558 = vpow.pop %v1557
        %v1559 = vmul.f32 %v1400, 1.442695
        %v1560 = vpow.pop %v1559
        %v1561 = vadd.f32 %v1402, %v1404
        %v1562 = vadd.f32 %v1561, %v1406
        %v1563 = vadd.f32 %v1562, %v1408
        %v1564 = vadd.f32 %v1563, %v1410
        %1565 = vadd.xlane.f32.xlu0 %v1564
        %v1566 = vpop.xlane.xlu0 %1565
        %v1567 = vadd.f32 %v1412, %v1414
        %v1568 = vadd.f32 %v1567, %v1416
        %v1569 = vadd.f32 %v1568, %v1418
        %v1570 = vadd.f32 %v1569, %v1420
        %1571 = vadd.xlane.f32.xlu0 %v1570
        %v1572 = vpop.xlane.xlu0 %1571
        %v1573 = vadd.f32 %v1422, %v1424
        %v1574 = vadd.f32 %v1573, %v1426
        %v1575 = vadd.f32 %v1574, %v1428
        %v1576 = vadd.f32 %v1575, %v1430
        %1577 = vadd.xlane.f32.xlu0 %v1576
        %v1578 = vpop.xlane.xlu0 %1577
        %v1579 = vadd.f32 %v1432, %v1434
        %v1580 = vadd.f32 %v1579, %v1436
        %v1581 = vadd.f32 %v1580, %v1438
        %v1582 = vadd.f32 %v1581, %v1440
        %1583 = vadd.xlane.f32.xlu0 %v1582
        %v1584 = vpop.xlane.xlu0 %1583
        %v1585 = vadd.f32 %v1442, %v1444
        %v1586 = vadd.f32 %v1585, %v1446
        %v1587 = vadd.f32 %v1586, %v1448
        %v1588 = vadd.f32 %v1587, %v1450
        %1589 = vadd.xlane.f32.xlu0 %v1588
        %v1590 = vpop.xlane.xlu0 %1589
        %v1591 = vadd.f32 %v1452, %v1454
        %v1592 = vadd.f32 %v1591, %v1456
        %v1593 = vadd.f32 %v1592, %v1458
        %v1594 = vadd.f32 %v1593, %v1460
        %1595 = vadd.xlane.f32.xlu0 %v1594
        %v1596 = vpop.xlane.xlu0 %1595
        %v1597 = vadd.f32 %v1462, %v1464
        %v1598 = vadd.f32 %v1597, %v1466
        %v1599 = vadd.f32 %v1598, %v1468
        %v1600 = vadd.f32 %v1599, %v1470
        %1601 = vadd.xlane.f32.xlu0 %v1600
        %v1602 = vpop.xlane.xlu0 %1601
        %v1603 = vadd.f32 %v1472, %v1474
        %v1604 = vadd.f32 %v1603, %v1476
        %v1605 = vadd.f32 %v1604, %v1478
        %v1606 = vadd.f32 %v1605, %v1480
        %1607 = vadd.xlane.f32.xlu0 %v1606
        %v1608 = vpop.xlane.xlu0 %1607
        %v1609 = vadd.f32 %v1482, %v1484
        %v1610 = vadd.f32 %v1609, %v1486
        %v1611 = vadd.f32 %v1610, %v1488
        %v1612 = vadd.f32 %v1611, %v1490
        %1613 = vadd.xlane.f32.xlu0 %v1612
        %v1614 = vpop.xlane.xlu0 %1613
        %v1615 = vadd.f32 %v1492, %v1494
        %v1616 = vadd.f32 %v1615, %v1496
        %v1617 = vadd.f32 %v1616, %v1498
        %v1618 = vadd.f32 %v1617, %v1500
        %1619 = vadd.xlane.f32.xlu0 %v1618
        %v1620 = vpop.xlane.xlu0 %1619
        %v1621 = vadd.f32 %v1502, %v1504
        %v1622 = vadd.f32 %v1621, %v1506
        %v1623 = vadd.f32 %v1622, %v1508
        %v1624 = vadd.f32 %v1623, %v1510
        %1625 = vadd.xlane.f32.xlu0 %v1624
        %v1626 = vpop.xlane.xlu0 %1625
        %v1627 = vadd.f32 %v1512, %v1514
        %v1628 = vadd.f32 %v1627, %v1516
        %v1629 = vadd.f32 %v1628, %v1518
        %v1630 = vadd.f32 %v1629, %v1520
        %1631 = vadd.xlane.f32.xlu0 %v1630
        %v1632 = vpop.xlane.xlu0 %1631
        %v1633 = vadd.f32 %v1522, %v1524
        %v1634 = vadd.f32 %v1633, %v1526
        %v1635 = vadd.f32 %v1634, %v1528
        %v1636 = vadd.f32 %v1635, %v1530
        %1637 = vadd.xlane.f32.xlu0 %v1636
        %v1638 = vpop.xlane.xlu0 %1637
        %v1639 = vadd.f32 %v1532, %v1534
        %v1640 = vadd.f32 %v1639, %v1536
        %v1641 = vadd.f32 %v1640, %v1538
        %v1642 = vadd.f32 %v1641, %v1540
        %1643 = vadd.xlane.f32.xlu0 %v1642
        %v1644 = vpop.xlane.xlu0 %1643
        %v1645 = vadd.f32 %v1542, %v1544
        %v1646 = vadd.f32 %v1645, %v1546
        %v1647 = vadd.f32 %v1646, %v1548
        %v1648 = vadd.f32 %v1647, %v1550
        %1649 = vadd.xlane.f32.xlu0 %v1648
        %v1650 = vpop.xlane.xlu0 %1649
        %v1651 = vadd.f32 %v1552, %v1554
        %v1652 = vadd.f32 %v1651, %v1556
        %v1653 = vadd.f32 %v1652, %v1558
        %v1654 = vadd.f32 %v1653, %v1560
        %1655 = vadd.xlane.f32.xlu0 %v1654
        %v1656 = vpop.xlane.xlu0 %1655
        %v1657 = vrcp.pop %v1566
        %v1658 = vrcp.pop %v1572
        %v1659 = vrcp.pop %v1578
        %v1660 = vrcp.pop %v1584
        %v1661 = vrcp.pop %v1590
        %v1662 = vrcp.pop %v1596
        %v1663 = vrcp.pop %v1602
        %v1664 = vrcp.pop %v1608
        %v1665 = vrcp.pop %v1614
        %v1666 = vrcp.pop %v1620
        %v1667 = vrcp.pop %v1626
        %v1668 = vrcp.pop %v1632
        %v1669 = vrcp.pop %v1638
        %v1670 = vrcp.pop %v1644
        %v1671 = vrcp.pop %v1650
        %v1672 = vrcp.pop %v1656
        %v1673 = vmul.f32 %v1402, %v1657
        %v1674 = vmul.f32 %v1404, %v1657
        %v1675 = vmul.f32 %v1406, %v1657
        %v1676 = vmul.f32 %v1408, %v1657
        %v1677 = vmul.f32 %v1410, %v1657
        %v1678 = vmul.f32 %v1412, %v1658
        %v1679 = vmul.f32 %v1414, %v1658
        %v1680 = vmul.f32 %v1416, %v1658
        %v1681 = vmul.f32 %v1418, %v1658
        %v1682 = vmul.f32 %v1420, %v1658
        %v1683 = vmul.f32 %v1422, %v1659
        %v1684 = vmul.f32 %v1424, %v1659
        %v1685 = vmul.f32 %v1426, %v1659
        %v1686 = vmul.f32 %v1428, %v1659
        %v1687 = vmul.f32 %v1430, %v1659
        %v1688 = vmul.f32 %v1432, %v1660
        %v1689 = vmul.f32 %v1434, %v1660
        %v1690 = vmul.f32 %v1436, %v1660
        %v1691 = vmul.f32 %v1438, %v1660
        %v1692 = vmul.f32 %v1440, %v1660
        %v1693 = vmul.f32 %v1442, %v1661
        %v1694 = vmul.f32 %v1444, %v1661
        %v1695 = vmul.f32 %v1446, %v1661
        %v1696 = vmul.f32 %v1448, %v1661
        %v1697 = vmul.f32 %v1450, %v1661
        %v1698 = vmul.f32 %v1452, %v1662
        %v1699 = vmul.f32 %v1454, %v1662
        %v1700 = vmul.f32 %v1456, %v1662
        %v1701 = vmul.f32 %v1458, %v1662
        %v1702 = vmul.f32 %v1460, %v1662
        %v1703 = vmul.f32 %v1462, %v1663
        %v1704 = vmul.f32 %v1464, %v1663
        %v1705 = vmul.f32 %v1466, %v1663
        %v1706 = vmul.f32 %v1468, %v1663
        %v1707 = vmul.f32 %v1470, %v1663
        %v1708 = vmul.f32 %v1472, %v1664
        %v1709 = vmul.f32 %v1474, %v1664
        %v1710 = vmul.f32 %v1476, %v1664
        %v1711 = vmul.f32 %v1478, %v1664
        %v1712 = vmul.f32 %v1480, %v1664
        %v1713 = vmul.f32 %v1482, %v1665
        %v1714 = vmul.f32 %v1484, %v1665
        %v1715 = vmul.f32 %v1486, %v1665
        %v1716 = vmul.f32 %v1488, %v1665
        %v1717 = vmul.f32 %v1490, %v1665
        %v1718 = vmul.f32 %v1492, %v1666
        %v1719 = vmul.f32 %v1494, %v1666
        %v1720 = vmul.f32 %v1496, %v1666
        %v1721 = vmul.f32 %v1498, %v1666
        %v1722 = vmul.f32 %v1500, %v1666
        %v1723 = vmul.f32 %v1502, %v1667
        %v1724 = vmul.f32 %v1504, %v1667
        %v1725 = vmul.f32 %v1506, %v1667
        %v1726 = vmul.f32 %v1508, %v1667
        %v1727 = vmul.f32 %v1510, %v1667
        %v1728 = vmul.f32 %v1512, %v1668
        %v1729 = vmul.f32 %v1514, %v1668
        %v1730 = vmul.f32 %v1516, %v1668
        %v1731 = vmul.f32 %v1518, %v1668
        %v1732 = vmul.f32 %v1520, %v1668
        %v1733 = vmul.f32 %v1522, %v1669
        %v1734 = vmul.f32 %v1524, %v1669
        %v1735 = vmul.f32 %v1526, %v1669
        %v1736 = vmul.f32 %v1528, %v1669
        %v1737 = vmul.f32 %v1530, %v1669
        %v1738 = vmul.f32 %v1532, %v1670
        %v1739 = vmul.f32 %v1534, %v1670
        %v1740 = vmul.f32 %v1536, %v1670
        %v1741 = vmul.f32 %v1538, %v1670
        %v1742 = vmul.f32 %v1540, %v1670
        %v1743 = vmul.f32 %v1542, %v1671
        %v1744 = vmul.f32 %v1544, %v1671
        %v1745 = vmul.f32 %v1546, %v1671
        %v1746 = vmul.f32 %v1548, %v1671
        %v1747 = vmul.f32 %v1550, %v1671
        %v1748 = vmul.f32 %v1552, %v1672
        %v1749 = vmul.f32 %v1554, %v1672
        %v1750 = vmul.f32 %v1556, %v1672
        %v1751 = vmul.f32 %v1558, %v1672
        %v1752 = vmul.f32 %v1560, %v1672
        %1753 = vst [vmem:[%s254] sm:$0xff] %v1673
        %1754 = vst [vmem:[%s254 + $0x8] sm:$0xff] %v1674
        %1755 = vst [vmem:[%s254 + $0x10] sm:$0xff] %v1675
        %1756 = vst [vmem:[%s254 + $0x18] sm:$0xff] %v1676
        %1757 = vst [vmem:[%s254 + $0x20] sm:$0xff] %v1677
        %1758 = vst [vmem:[%s254 + $0x28] sm:$0xff] %v1678
        %1759 = vst [vmem:[%s254 + $0x30] sm:$0xff] %v1679
        %1760 = vst [vmem:[%s254 + $0x38] sm:$0xff] %v1680
        %1761 = vst [vmem:[%s254 + $0x40] sm:$0xff] %v1681
        %1762 = vst [vmem:[%s254 + $0x48] sm:$0xff] %v1682
        %1763 = vst [vmem:[%s254 + $0x50] sm:$0xff] %v1683
        %1764 = vst [vmem:[%s254 + $0x58] sm:$0xff] %v1684
        %1765 = vst [vmem:[%s254 + $0x60] sm:$0xff] %v1685
        %1766 = vst [vmem:[%s254 + $0x68] sm:$0xff] %v1686
        %1767 = vst [vmem:[%s254 + $0x70] sm:$0xff] %v1687
        %1768 = vst [vmem:[%s254 + $0x78] sm:$0xff] %v1688
        %1769 = vst [vmem:[%s254 + $0x80] sm:$0xff] %v1689
        %1770 = vst [vmem:[%s254 + $0x88] sm:$0xff] %v1690
        %1771 = vst [vmem:[%s254 + $0x90] sm:$0xff] %v1691
        %1772 = vst [vmem:[%s254 + $0x98] sm:$0xff] %v1692
        %1773 = vst [vmem:[%s254 + $0xa0] sm:$0xff] %v1693
        %1774 = vst [vmem:[%s254 + $0xa8] sm:$0xff] %v1694
        %1775 = vst [vmem:[%s254 + $0xb0] sm:$0xff] %v1695
        %1776 = vst [vmem:[%s254 + $0xb8] sm:$0xff] %v1696
        %1777 = vst [vmem:[%s254 + $0xc0] sm:$0xff] %v1697
        %1778 = vst [vmem:[%s254 + $0xc8] sm:$0xff] %v1698
        %1779 = vst [vmem:[%s254 + $0xd0] sm:$0xff] %v1699
        %1780 = vst [vmem:[%s254 + $0xd8] sm:$0xff] %v1700
        %1781 = vst [vmem:[%s254 + $0xe0] sm:$0xff] %v1701
        %1782 = vst [vmem:[%s254 + $0xe8] sm:$0xff] %v1702
        %1783 = vst [vmem:[%s254 + $0xf0] sm:$0xff] %v1703
        %1784 = vst [vmem:[%s254 + $0xf8] sm:$0xff] %v1704
        %1785 = vst [vmem:[%s254 + $0x100] sm:$0xff] %v1705
        %1786 = vst [vmem:[%s254 + $0x108] sm:$0xff] %v1706
        %1787 = vst [vmem:[%s254 + $0x110] sm:$0xff] %v1707
        %1788 = vst [vmem:[%s254 + $0x118] sm:$0xff] %v1708
        %1789 = vst [vmem:[%s254 + $0x120] sm:$0xff] %v1709
        %1790 = vst [vmem:[%s254 + $0x128] sm:$0xff] %v1710
        %1791 = vst [vmem:[%s254 + $0x130] sm:$0xff] %v1711
        %1792 = vst [vmem:[%s254 + $0x138] sm:$0xff] %v1712
        %1793 = vst [vmem:[%s254 + $0x140] sm:$0xff] %v1713
        %1794 = vst [vmem:[%s254 + $0x148] sm:$0xff] %v1714
        %1795 = vst [vmem:[%s254 + $0x150] sm:$0xff] %v1715
        %1796 = vst [vmem:[%s254 + $0x158] sm:$0xff] %v1716
        %1797 = vst [vmem:[%s254 + $0x160] sm:$0xff] %v1717
        %1798 = vst [vmem:[%s254 + $0x168] sm:$0xff] %v1718
        %1799 = vst [vmem:[%s254 + $0x170] sm:$0xff] %v1719
        %1800 = vst [vmem:[%s254 + $0x178] sm:$0xff] %v1720
        %1801 = vst [vmem:[%s254 + $0x180] sm:$0xff] %v1721
        %1802 = vst [vmem:[%s254 + $0x188] sm:$0xff] %v1722
        %1803 = vst [vmem:[%s254 + $0x190] sm:$0xff] %v1723
        %1804 = vst [vmem:[%s254 + $0x198] sm:$0xff] %v1724
        %1805 = vst [vmem:[%s254 + $0x1a0] sm:$0xff] %v1725
        %1806 = vst [vmem:[%s254 + $0x1a8] sm:$0xff] %v1726
        %1807 = vst [vmem:[%s254 + $0x1b0] sm:$0xff] %v1727
        %1808 = vst [vmem:[%s254 + $0x1b8] sm:$0xff] %v1728
        %1809 = vst [vmem:[%s254 + $0x1c0] sm:$0xff] %v1729
        %1810 = vst [vmem:[%s254 + $0x1c8] sm:$0xff] %v1730
        %1811 = vst [vmem:[%s254 + $0x1d0] sm:$0xff] %v1731
        %1812 = vst [vmem:[%s254 + $0x1d8] sm:$0xff] %v1732
        %1813 = vst [vmem:[%s254 + $0x1e0] sm:$0xff] %v1733
        %1814 = vst [vmem:[%s254 + $0x1e8] sm:$0xff] %v1734
        %1815 = vst [vmem:[%s254 + $0x1f0] sm:$0xff] %v1735
        %1816 = vst [vmem:[%s254 + $0x1f8] sm:$0xff] %v1736
        %1817 = vst [vmem:[%s254 + $0x200] sm:$0xff] %v1737
        %1818 = vst [vmem:[%s254 + $0x208] sm:$0xff] %v1738
        %1819 = vst [vmem:[%s254 + $0x210] sm:$0xff] %v1739
        %1820 = vst [vmem:[%s254 + $0x218] sm:$0xff] %v1740
        %1821 = vst [vmem:[%s254 + $0x220] sm:$0xff] %v1741
        %1822 = vst [vmem:[%s254 + $0x228] sm:$0xff] %v1742
        %1823 = vst [vmem:[%s254 + $0x230] sm:$0xff] %v1743
        %1824 = vst [vmem:[%s254 + $0x238] sm:$0xff] %v1744
        %1825 = vst [vmem:[%s254 + $0x240] sm:$0xff] %v1745
        %1826 = vst [vmem:[%s254 + $0x248] sm:$0xff] %v1746
        %1827 = vst [vmem:[%s254 + $0x250] sm:$0xff] %v1747
        %1828 = vst [vmem:[%s254 + $0x258] sm:$0xff] %v1748
        %1829 = vst [vmem:[%s254 + $0x260] sm:$0xff] %v1749
        %1830 = vst [vmem:[%s254 + $0x268] sm:$0xff] %v1750
        %1831 = vst [vmem:[%s254 + $0x270] sm:$0xff] %v1751
        %1832 = vst [vmem:[%s254 + $0x278] sm:$0xff] %v1752
        %s1833 = sand.u32 %s133, 1
        %s1834 = scalar_lea.sflag [#allocation4], %s1833
        %s1835 = sand.u32 %s133, 1
        %s1836 = smul.addr %s1835, 640
        %s1837 = scalar_lea.vmem [#allocation8], %s1836
        // Predicated region
        $region49: #{tpu_custom_call.1} parent=35 // pred_check
          %p1838 = pneg %p143
        $region50: #{tpu_custom_call.1} parent=35 // pred_check_branch
          %1840 = sbr.rel (%p1838) target = $region52
        $region51: #{tpu_custom_call.1} parent=35 // pred_region
          %s1841 = smul.u32 16, %s27
          %s1843 = ssub.s32 10240, 10240
          %1844 = vsyncadd %s1834, %s1843
          %s1845 = smul.addr %s1841, 5
          %s1846 = smul.addr %s26, 400
          %s1847 = sadd.s32 %s1845, %s1846
          %s1848 = smul.addr %s1847, 128
          %s1849 = scalar_lea.hbm %s4, %s1848
          %s1850 = sshll.u32 %s1837, 4
          %s1851 = int_to_ptr.vmem [resolvable:$true] %s1850
          %1856 = dma.vmem_to_hbm [thread:$0]  %s1851, 10240, %s1849, %s1834, 640, 640, 40
        $region52: #{tpu_custom_call.1} parent=35 // pred_fallthru
          _
      $region36: #{tpu_custom_call.1} parent=5 // pred_fallthru
        _
      %p1857 = scmp.le.s32.totalorder 2, %s17
      // Predicated region
      $region53: #{tpu_custom_call.1} parent=5 // pred_check
        %p1858 = pneg %p1857
      $region54: #{tpu_custom_call.1} parent=5 // pred_check_branch
        %1860 = sbr.rel (%p1858) target = $region56
      $region55: #{tpu_custom_call.1} parent=5 // pred_region
        %s1861 = ssub.s32 %s17, 2
        // Predicated region
        $region57: #{tpu_custom_call.1} parent=55 // pred_check
          %p1862 = pneg %p149
        $region58: #{tpu_custom_call.1} parent=55 // pred_check_branch
          %1864 = sbr.rel (%p1862) target = $region60
        $region59: #{tpu_custom_call.1} parent=55 // pred_region
          %s1865 = sand.u32 %s134, 1
          %s1866 = scalar_lea.sflag [#allocation4], %s1865
          %s1867 = sand.u32 %s134, 1
          %s1868 = smul.addr %s1867, 640
          %s1869 = scalar_lea.vmem [#allocation8], %s1868
          %1870 = dma.done %s1866, 10240
        $region60: #{tpu_custom_call.1} parent=55 // pred_fallthru
          _
      $region56: #{tpu_custom_call.1} parent=5 // pred_fallthru
        _
    $region6: #{tpu_custom_call.1} parent=1 // loop_footer
      %s21 = sadd.s32 1, %s17
    $region7: #{tpu_custom_call.1} parent=1 // loop_footer_branch
      %16 = sbr.rel target = $region3
    $region8: #{tpu_custom_call.1} parent=1 // loop_exit
      _
    %1871 = vsyncpa [#allocation3], 1
    %s1872 = scalar_lea.sflag [#allocation3], 1
    %1873 = vsyncpa %s1872, 1
    %1874 = vsyncpa [#allocation6], 1
    %1875 = vsyncpa [#allocation4], 1
    %s1876 = scalar_lea.sflag [#allocation4], 1
    %1877 = vsyncpa %s1876, 1

</llo_original>
